<compile_context>
chip_gen: v6e
topology: v6e:2x2x1
jax: 0.10.0
libtpu: 0.0.40
codegen_flags: <defaults>
</compile_context>

<pallas_src>
import math

import jax
import jax.numpy as jnp
from jax.experimental import pallas as pl
from jax.experimental.pallas import tpu as pltpu

# ----------------------------- model dims -----------------------------------
B, S, D = 2, 8, 32          # batch, seq, d_model
H = 4                       # attention heads
DK = D // H                 # 8
D_FF = 64
BS = B * S
EPS = 1e-6
NEG_INF = -1e9

# Row layout of the single packed "vecs" input (shape (N_VEC_ROWS, 128)).
ROW_LN1_G, ROW_LN1_B, ROW_LN2_G, ROW_LN2_B = 0, 1, 2, 3
ROW_BO, ROW_B2, ROW_B1, ROW_BQKV, ROW_MASK = 4, 5, 6, 7, 8
N_VEC_ROWS = 9
VEC_W = 128


# ----------------------------- fused kernel ----------------------------------
def _layer_norm(x, g, b):
    # matches annotated-transformer LayerNorm: a_2*(x-mean)/(std+eps)+b_2, ddof=1
    mean = jnp.mean(x, axis=-1, keepdims=True)
    d = x - mean
    var = jnp.sum(d * d, axis=-1, keepdims=True) * (1.0 / (x.shape[-1] - 1))
    # exact reciprocal here (review: approx EUP recip would propagate through
    # every downstream matmul); only 2*16 rows so the cost is negligible.
    return g * (d / (jnp.sqrt(var) + EPS)) + b


def encoder_layer_kernel(x_ref, vecs_ref, wqkv_ref, wo_ref, w1_ref, w2_ref, o_ref):
    x = x_ref[...]                                            # (B*S, D)

    ln1g = vecs_ref[ROW_LN1_G:ROW_LN1_G + 1, 0:D]
    ln1b = vecs_ref[ROW_LN1_B:ROW_LN1_B + 1, 0:D]
    ln2g = vecs_ref[ROW_LN2_G:ROW_LN2_G + 1, 0:D]
    ln2b = vecs_ref[ROW_LN2_B:ROW_LN2_B + 1, 0:D]
    bo = vecs_ref[ROW_BO:ROW_BO + 1, 0:D]
    b2 = vecs_ref[ROW_B2:ROW_B2 + 1, 0:D]
    b1 = vecs_ref[ROW_B1:ROW_B1 + 1, 0:D_FF]
    bqkv = vecs_ref[ROW_BQKV:ROW_BQKV + 1, 0:3 * D]
    amask = vecs_ref[ROW_MASK:ROW_MASK + 1, 0:BS]             # additive key mask (1, B*S)

    # ---- sublayer 0: x + self_attn(LN1(x)) ---------------------------------
    xn = _layer_norm(x, ln1g, ln1b)
    qkv = jnp.dot(xn, wqkv_ref[...],
                  preferred_element_type=jnp.float32) + bqkv  # (B*S, 3D)
    q = qkv[:, 0 * D:1 * D]          # already scaled by 1/sqrt(DK) (folded in weights)
    k = qkv[:, 1 * D:2 * D]
    v = qkv[:, 2 * D:3 * D]

    wo = wo_ref[...]                                          # (D, D)
    y_blocks = []
    for b in range(B):                                        # static unroll over batches
        r0, r1 = b * S, (b + 1) * S
        q_b = q[r0:r1, :]                                     # (S, D) sublane slice
        kTb = k[r0:r1, :].T                                   # (D, S): K pre-transposed once
        v_b = v[r0:r1, :]                                     # (S, D)
        am_b = amask[:, r0:r1]                                # (1, S) key mask for batch b

        y_b = jnp.zeros((S, D), jnp.float32)
        for h in range(H):                                    # static unroll over heads
            c0, c1 = h * DK, (h + 1) * DK
            s = jnp.dot(q_b[:, c0:c1], kTb[c0:c1, :],
                        preferred_element_type=jnp.float32) + am_b       # (S, S)
            s = s - jnp.max(s, axis=-1, keepdims=True)
            p = jnp.exp(s)
            p = p * pl.reciprocal(jnp.sum(p, axis=-1, keepdims=True), approx=True)
            o_bh = jnp.dot(p, v_b[:, c0:c1],
                           preferred_element_type=jnp.float32)           # (S, DK)
            # accumulate output projection per head (Wo row slice is sublane-aligned,
            # DK = 8 = one sublane group) -> no lane-axis concat of heads.
            y_b = y_b + jnp.dot(o_bh, wo[c0:c1, :],
                                preferred_element_type=jnp.float32)      # (S, D)
        y_blocks.append(y_b)

    y1 = x + jnp.concatenate(y_blocks, axis=0) + bo           # fused residual add

    # ---- sublayer 1: y1 + feed_forward(LN2(y1)) ----------------------------
    y1n = _layer_norm(y1, ln2g, ln2b)
    h1 = jnp.maximum(
        jnp.dot(y1n, w1_ref[...], preferred_element_type=jnp.float32) + b1, 0.0)
    o_ref[...] = y1 + (jnp.dot(h1, w2_ref[...], preferred_element_type=jnp.float32)
                       + b2)                                  # fused residual add


# ----------------------------- parameters ------------------------------------
def init_params(key):
    ks = jax.random.split(key, 12)
    scale = 0.05
    inv_sqrt_dk = 1.0 / math.sqrt(DK)
    wq = scale * jax.random.normal(ks[0], (D, D), jnp.float32)
    bq = scale * jax.random.normal(ks[1], (1, D), jnp.float32)
    wk = scale * jax.random.normal(ks[2], (D, D), jnp.float32)
    bk = scale * jax.random.normal(ks[3], (1, D), jnp.float32)
    wv = scale * jax.random.normal(ks[4], (D, D), jnp.float32)
    bv = scale * jax.random.normal(ks[5], (1, D), jnp.float32)
    return {
        # LayerNorms (a_2 = ones, b_2 = zeros, as in module __init__)
        "ln1_g": jnp.ones((1, D), jnp.float32),
        "ln1_b": jnp.zeros((1, D), jnp.float32),
        "ln2_g": jnp.ones((1, D), jnp.float32),
        "ln2_b": jnp.zeros((1, D), jnp.float32),
        # Fused QKV projection, (in, out) layout (= torch W.T); the 1/sqrt(d_k)
        # attention scale is folded into the Q slice (weight AND bias).
        "wqkv": jnp.concatenate([wq * inv_sqrt_dk, wk, wv], axis=1),   # (D, 3D)
        "bqkv": jnp.concatenate([bq * inv_sqrt_dk, bk, bv], axis=1),   # (1, 3D)
        # Output projection
        "wo": scale * jax.random.normal(ks[6], (D, D), jnp.float32),
        "bo": scale * jax.random.normal(ks[7], (1, D), jnp.float32),
        # PositionwiseFeedForward
        "w1": scale * jax.random.normal(ks[8], (D, D_FF), jnp.float32),
        "b1": scale * jax.random.normal(ks[9], (1, D_FF), jnp.float32),
        "w2": scale * jax.random.normal(ks[10], (D_FF, D), jnp.float32),
        "b2": scale * jax.random.normal(ks[11], (1, D), jnp.float32),
    }


# ----------------------------- forward pass -----------------------------------
_VMEM = pl.BlockSpec(memory_space=pltpu.MemorySpace.VMEM)   # whole array in VMEM, no grid


def _pad_row(v):
    v = v.reshape(1, -1).astype(jnp.float32)
    return jnp.pad(v, ((0, 0), (0, VEC_W - v.shape[1])))


@jax.jit
def encoder_layer_forward(params, x, mask):
    """x: (B, S, D) float32; mask: (B, 1, S) 0/1 key mask (1 = attend)."""
    x2d = x.reshape(BS, D)                                   # free leading-dim reshape
    # runtime additive key mask, computed once in the wrapper (tiny, fused by XLA)
    add_mask = jnp.where(mask.reshape(B, S) >= 0.5, 0.0, NEG_INF).reshape(1, BS)
    # pack every small vector + the mask into ONE lane-dense (9,128) buffer -> 1 DMA
    vecs = jnp.concatenate(
        [_pad_row(params["ln1_g"]), _pad_row(params["ln1_b"]),
         _pad_row(params["ln2_g"]), _pad_row(params["ln2_b"]),
         _pad_row(params["bo"]), _pad_row(params["b2"]),
         _pad_row(params["b1"]), _pad_row(params["bqkv"]),
         _pad_row(add_mask)], axis=0)                         # (N_VEC_ROWS, 128)

    out2d = pl.pallas_call(
        encoder_layer_kernel,
        out_shape=jax.ShapeDtypeStruct((BS, D), jnp.float32),
        in_specs=[_VMEM] * 6,
        out_specs=_VMEM,
    )(x2d, vecs, params["wqkv"], params["wo"], params["w1"], params["w2"])
    return out2d.reshape(B, S, D)


# ----------------------------- main -------------------------------------------
if __name__ == "__main__":
    key = jax.random.PRNGKey(0)
    kx, kp = jax.random.split(key)
    x = jax.random.normal(kx, (B, S, D), jnp.float32)
    # key mask: all positions valid except the last key position of batch 1
    mask = jnp.ones((B, 1, S), jnp.float32).at[1, 0, S - 1].set(0.0)
    params = init_params(kp)

    out = jax.block_until_ready(encoder_layer_forward(params, x, mask))
    assert out.shape == (B, S, D) and out.dtype == jnp.float32
    assert bool(jnp.all(jnp.isfinite(out)))
    print("KERNEL_OK")
</pallas_src>

<mosaic_0001>
module attributes {stable_mosaic.version = 11 : i64} {
  func.func @encoder_layer_kernel(%arg0: memref<16x32xf32, #tpu.memory_space<vmem>>, %arg1: memref<9x128xf32, #tpu.memory_space<vmem>>, %arg2: memref<32x96xf32, #tpu.memory_space<vmem>>, %arg3: memref<32x32xf32, #tpu.memory_space<vmem>>, %arg4: memref<32x64xf32, #tpu.memory_space<vmem>>, %arg5: memref<64x32xf32, #tpu.memory_space<vmem>>, %arg6: memref<16x32xf32, #tpu.memory_space<vmem>>) attributes {dimension_semantics = [], scalar_prefetch = 0 : i64, scratch_operands = 0 : i64, tpu.core_type = #tpu.core_type<tc>} {
    %c0 = arith.constant 0 : index
    %c0_0 = arith.constant 0 : index
    %0 = vector.load %arg0[%c0, %c0_0] : memref<16x32xf32, #tpu.memory_space<vmem>>, vector<16x32xf32>
    %c0_1 = arith.constant 0 : index
    %c0_2 = arith.constant 0 : index
    %1 = vector.load %arg1[%c0_1, %c0_2] : memref<9x128xf32, #tpu.memory_space<vmem>>, vector<1x32xf32>
    %c1 = arith.constant 1 : index
    %c0_3 = arith.constant 0 : index
    %2 = vector.load %arg1[%c1, %c0_3] : memref<9x128xf32, #tpu.memory_space<vmem>>, vector<1x32xf32>
    %c2 = arith.constant 2 : index
    %c0_4 = arith.constant 0 : index
    %3 = vector.load %arg1[%c2, %c0_4] : memref<9x128xf32, #tpu.memory_space<vmem>>, vector<1x32xf32>
    %c3 = arith.constant 3 : index
    %c0_5 = arith.constant 0 : index
    %4 = vector.load %arg1[%c3, %c0_5] : memref<9x128xf32, #tpu.memory_space<vmem>>, vector<1x32xf32>
    %c4 = arith.constant 4 : index
    %c0_6 = arith.constant 0 : index
    %5 = vector.load %arg1[%c4, %c0_6] : memref<9x128xf32, #tpu.memory_space<vmem>>, vector<1x32xf32>
    %c5 = arith.constant 5 : index
    %c0_7 = arith.constant 0 : index
    %6 = vector.load %arg1[%c5, %c0_7] : memref<9x128xf32, #tpu.memory_space<vmem>>, vector<1x32xf32>
    %c6 = arith.constant 6 : index
    %c0_8 = arith.constant 0 : index
    %7 = vector.load %arg1[%c6, %c0_8] : memref<9x128xf32, #tpu.memory_space<vmem>>, vector<1x64xf32>
    %c7 = arith.constant 7 : index
    %c0_9 = arith.constant 0 : index
    %8 = vector.load %arg1[%c7, %c0_9] : memref<9x128xf32, #tpu.memory_space<vmem>>, vector<1x96xf32>
    %c8 = arith.constant 8 : index
    %c0_10 = arith.constant 0 : index
    %9 = vector.load %arg1[%c8, %c0_10] : memref<9x128xf32, #tpu.memory_space<vmem>>, vector<1x16xf32>
    %cst = arith.constant dense<0.000000e+00> : vector<16xf32>
    %10 = vector.multi_reduction <add>, %0, %cst [1] : vector<16x32xf32> to vector<16xf32>
    %11 = vector.shape_cast %10 : vector<16xf32> to vector<16x1xf32>
    %cst_11 = arith.constant 3.200000e+01 : f32
    %12 = vector.broadcast %cst_11 : f32 to vector<16x1xf32>
    %13 = arith.divf %11, %12 : vector<16x1xf32>
    %14 = vector.broadcast %13 : vector<16x1xf32> to vector<16x32xf32>
    %15 = arith.subf %0, %14 : vector<16x32xf32>
    %16 = arith.mulf %15, %15 : vector<16x32xf32>
    %cst_12 = arith.constant dense<0.000000e+00> : vector<16xf32>
    %17 = vector.multi_reduction <add>, %16, %cst_12 [1] : vector<16x32xf32> to vector<16xf32>
    %18 = vector.shape_cast %17 : vector<16xf32> to vector<16x1xf32>
    %cst_13 = arith.constant 0.0322580636 : f32
    %19 = vector.broadcast %cst_13 : f32 to vector<16x1xf32>
    %20 = arith.mulf %18, %19 : vector<16x1xf32>
    %21 = math.sqrt %20 : vector<16x1xf32>
    %cst_14 = arith.constant 9.99999997E-7 : f32
    %22 = vector.broadcast %cst_14 : f32 to vector<16x1xf32>
    %23 = arith.addf %21, %22 : vector<16x1xf32>
    %24 = vector.broadcast %23 : vector<16x1xf32> to vector<16x32xf32>
    %25 = arith.divf %15, %24 : vector<16x32xf32>
    %26 = vector.broadcast %1 : vector<1x32xf32> to vector<16x32xf32>
    %27 = arith.mulf %26, %25 : vector<16x32xf32>
    %28 = vector.broadcast %2 : vector<1x32xf32> to vector<16x32xf32>
    %29 = arith.addf %27, %28 : vector<16x32xf32>
    %c0_15 = arith.constant 0 : index
    %c0_16 = arith.constant 0 : index
    %30 = vector.load %arg2[%c0_15, %c0_16] : memref<32x96xf32, #tpu.memory_space<vmem>>, vector<32x96xf32>
    %cst_17 = arith.constant dense<0.000000e+00> : vector<16x96xf32>
    %31 = tpu.matmul %29, %30, %cst_17 {dimension_numbers = #tpu.dot_dimension_numbers<[1], [0], [0], [1], [0, 0, 1, 1], [], []>} : vector<16x32xf32>, vector<32x96xf32>, vector<16x96xf32> -> vector<16x96xf32>
    %32 = vector.broadcast %8 : vector<1x96xf32> to vector<16x96xf32>
    %33 = arith.addf %31, %32 : vector<16x96xf32>
    %34 = vector.extract_strided_slice %33 {offsets = [0, 0], sizes = [16, 32], strides = [1, 1]} : vector<16x96xf32> to vector<16x32xf32>
    %35 = vector.extract_strided_slice %33 {offsets = [0, 32], sizes = [16, 32], strides = [1, 1]} : vector<16x96xf32> to vector<16x32xf32>
    %36 = vector.extract_strided_slice %33 {offsets = [0, 64], sizes = [16, 32], strides = [1, 1]} : vector<16x96xf32> to vector<16x32xf32>
    %c0_18 = arith.constant 0 : index
    %c0_19 = arith.constant 0 : index
    %37 = vector.load %arg3[%c0_18, %c0_19] : memref<32x32xf32, #tpu.memory_space<vmem>>, vector<32x32xf32>
    %38 = vector.extract_strided_slice %34 {offsets = [0, 0], sizes = [8, 32], strides = [1, 1]} : vector<16x32xf32> to vector<8x32xf32>
    %39 = vector.extract_strided_slice %35 {offsets = [0, 0], sizes = [8, 32], strides = [1, 1]} : vector<16x32xf32> to vector<8x32xf32>
    %40 = tpu.transpose %39, [1, 0] : vector<8x32xf32> -> vector<32x8xf32>
    %41 = vector.extract_strided_slice %36 {offsets = [0, 0], sizes = [8, 32], strides = [1, 1]} : vector<16x32xf32> to vector<8x32xf32>
    %42 = vector.extract_strided_slice %9 {offsets = [0, 0], sizes = [1, 8], strides = [1, 1]} : vector<1x16xf32> to vector<1x8xf32>
    %cst_20 = arith.constant 0.000000e+00 : f32
    %43 = vector.broadcast %cst_20 : f32 to vector<8x32xf32>
    %44 = vector.extract_strided_slice %38 {offsets = [0, 0], sizes = [8, 8], strides = [1, 1]} : vector<8x32xf32> to vector<8x8xf32>
    %45 = vector.extract_strided_slice %40 {offsets = [0, 0], sizes = [8, 8], strides = [1, 1]} : vector<32x8xf32> to vector<8x8xf32>
    %cst_21 = arith.constant dense<0.000000e+00> : vector<8x8xf32>
    %46 = tpu.matmul %44, %45, %cst_21 {dimension_numbers = #tpu.dot_dimension_numbers<[1], [0], [0], [1], [0, 0, 1, 1], [], []>} : vector<8x8xf32>, vector<8x8xf32>, vector<8x8xf32> -> vector<8x8xf32>
    %47 = vector.broadcast %42 : vector<1x8xf32> to vector<8x8xf32>
    %48 = arith.addf %46, %47 : vector<8x8xf32>
    %cst_22 = arith.constant dense<0xFF800000> : vector<8xf32>
    %49 = vector.multi_reduction <maximumf>, %48, %cst_22 [1] : vector<8x8xf32> to vector<8xf32>
    %50 = vector.shape_cast %49 : vector<8xf32> to vector<8x1xf32>
    %51 = vector.broadcast %50 : vector<8x1xf32> to vector<8x8xf32>
    %52 = arith.subf %48, %51 : vector<8x8xf32>
    %53 = math.exp %52 : vector<8x8xf32>
    %cst_23 = arith.constant dense<0.000000e+00> : vector<8xf32>
    %54 = vector.multi_reduction <add>, %53, %cst_23 [1] : vector<8x8xf32> to vector<8xf32>
    %55 = vector.shape_cast %54 : vector<8xf32> to vector<8x1xf32>
    %56 = tpu.reciprocal %55 {approx = true} : vector<8x1xf32> -> vector<8x1xf32>
    %57 = vector.broadcast %56 : vector<8x1xf32> to vector<8x8xf32>
    %58 = arith.mulf %53, %57 : vector<8x8xf32>
    %59 = vector.extract_strided_slice %41 {offsets = [0, 0], sizes = [8, 8], strides = [1, 1]} : vector<8x32xf32> to vector<8x8xf32>
    %cst_24 = arith.constant dense<0.000000e+00> : vector<8x8xf32>
    %60 = tpu.matmul %58, %59, %cst_24 {dimension_numbers = #tpu.dot_dimension_numbers<[1], [0], [0], [1], [0, 0, 1, 1], [], []>} : vector<8x8xf32>, vector<8x8xf32>, vector<8x8xf32> -> vector<8x8xf32>
    %61 = vector.extract_strided_slice %37 {offsets = [0, 0], sizes = [8, 32], strides = [1, 1]} : vector<32x32xf32> to vector<8x32xf32>
    %cst_25 = arith.constant dense<0.000000e+00> : vector<8x32xf32>
    %62 = tpu.matmul %60, %61, %cst_25 {dimension_numbers = #tpu.dot_dimension_numbers<[1], [0], [0], [1], [0, 0, 1, 1], [], []>} : vector<8x8xf32>, vector<8x32xf32>, vector<8x32xf32> -> vector<8x32xf32>
    %63 = arith.addf %43, %62 : vector<8x32xf32>
    %64 = vector.extract_strided_slice %38 {offsets = [0, 8], sizes = [8, 8], strides = [1, 1]} : vector<8x32xf32> to vector<8x8xf32>
    %65 = vector.extract_strided_slice %40 {offsets = [8, 0], sizes = [8, 8], strides = [1, 1]} : vector<32x8xf32> to vector<8x8xf32>
    %cst_26 = arith.constant dense<0.000000e+00> : vector<8x8xf32>
    %66 = tpu.matmul %64, %65, %cst_26 {dimension_numbers = #tpu.dot_dimension_numbers<[1], [0], [0], [1], [0, 0, 1, 1], [], []>} : vector<8x8xf32>, vector<8x8xf32>, vector<8x8xf32> -> vector<8x8xf32>
    %67 = vector.broadcast %42 : vector<1x8xf32> to vector<8x8xf32>
    %68 = arith.addf %66, %67 : vector<8x8xf32>
    %cst_27 = arith.constant dense<0xFF800000> : vector<8xf32>
    %69 = vector.multi_reduction <maximumf>, %68, %cst_27 [1] : vector<8x8xf32> to vector<8xf32>
    %70 = vector.shape_cast %69 : vector<8xf32> to vector<8x1xf32>
    %71 = vector.broadcast %70 : vector<8x1xf32> to vector<8x8xf32>
    %72 = arith.subf %68, %71 : vector<8x8xf32>
    %73 = math.exp %72 : vector<8x8xf32>
    %cst_28 = arith.constant dense<0.000000e+00> : vector<8xf32>
    %74 = vector.multi_reduction <add>, %73, %cst_28 [1] : vector<8x8xf32> to vector<8xf32>
    %75 = vector.shape_cast %74 : vector<8xf32> to vector<8x1xf32>
    %76 = tpu.reciprocal %75 {approx = true} : vector<8x1xf32> -> vector<8x1xf32>
    %77 = vector.broadcast %76 : vector<8x1xf32> to vector<8x8xf32>
    %78 = arith.mulf %73, %77 : vector<8x8xf32>
    %79 = vector.extract_strided_slice %41 {offsets = [0, 8], sizes = [8, 8], strides = [1, 1]} : vector<8x32xf32> to vector<8x8xf32>
    %cst_29 = arith.constant dense<0.000000e+00> : vector<8x8xf32>
    %80 = tpu.matmul %78, %79, %cst_29 {dimension_numbers = #tpu.dot_dimension_numbers<[1], [0], [0], [1], [0, 0, 1, 1], [], []>} : vector<8x8xf32>, vector<8x8xf32>, vector<8x8xf32> -> vector<8x8xf32>
    %81 = vector.extract_strided_slice %37 {offsets = [8, 0], sizes = [8, 32], strides = [1, 1]} : vector<32x32xf32> to vector<8x32xf32>
    %cst_30 = arith.constant dense<0.000000e+00> : vector<8x32xf32>
    %82 = tpu.matmul %80, %81, %cst_30 {dimension_numbers = #tpu.dot_dimension_numbers<[1], [0], [0], [1], [0, 0, 1, 1], [], []>} : vector<8x8xf32>, vector<8x32xf32>, vector<8x32xf32> -> vector<8x32xf32>
    %83 = arith.addf %63, %82 : vector<8x32xf32>
    %84 = vector.extract_strided_slice %38 {offsets = [0, 16], sizes = [8, 8], strides = [1, 1]} : vector<8x32xf32> to vector<8x8xf32>
    %85 = vector.extract_strided_slice %40 {offsets = [16, 0], sizes = [8, 8], strides = [1, 1]} : vector<32x8xf32> to vector<8x8xf32>
    %cst_31 = arith.constant dense<0.000000e+00> : vector<8x8xf32>
    %86 = tpu.matmul %84, %85, %cst_31 {dimension_numbers = #tpu.dot_dimension_numbers<[1], [0], [0], [1], [0, 0, 1, 1], [], []>} : vector<8x8xf32>, vector<8x8xf32>, vector<8x8xf32> -> vector<8x8xf32>
    %87 = vector.broadcast %42 : vector<1x8xf32> to vector<8x8xf32>
    %88 = arith.addf %86, %87 : vector<8x8xf32>
    %cst_32 = arith.constant dense<0xFF800000> : vector<8xf32>
    %89 = vector.multi_reduction <maximumf>, %88, %cst_32 [1] : vector<8x8xf32> to vector<8xf32>
    %90 = vector.shape_cast %89 : vector<8xf32> to vector<8x1xf32>
    %91 = vector.broadcast %90 : vector<8x1xf32> to vector<8x8xf32>
    %92 = arith.subf %88, %91 : vector<8x8xf32>
    %93 = math.exp %92 : vector<8x8xf32>
    %cst_33 = arith.constant dense<0.000000e+00> : vector<8xf32>
    %94 = vector.multi_reduction <add>, %93, %cst_33 [1] : vector<8x8xf32> to vector<8xf32>
    %95 = vector.shape_cast %94 : vector<8xf32> to vector<8x1xf32>
    %96 = tpu.reciprocal %95 {approx = true} : vector<8x1xf32> -> vector<8x1xf32>
    %97 = vector.broadcast %96 : vector<8x1xf32> to vector<8x8xf32>
    %98 = arith.mulf %93, %97 : vector<8x8xf32>
    %99 = vector.extract_strided_slice %41 {offsets = [0, 16], sizes = [8, 8], strides = [1, 1]} : vector<8x32xf32> to vector<8x8xf32>
    %cst_34 = arith.constant dense<0.000000e+00> : vector<8x8xf32>
    %100 = tpu.matmul %98, %99, %cst_34 {dimension_numbers = #tpu.dot_dimension_numbers<[1], [0], [0], [1], [0, 0, 1, 1], [], []>} : vector<8x8xf32>, vector<8x8xf32>, vector<8x8xf32> -> vector<8x8xf32>
    %101 = vector.extract_strided_slice %37 {offsets = [16, 0], sizes = [8, 32], strides = [1, 1]} : vector<32x32xf32> to vector<8x32xf32>
    %cst_35 = arith.constant dense<0.000000e+00> : vector<8x32xf32>
    %102 = tpu.matmul %100, %101, %cst_35 {dimension_numbers = #tpu.dot_dimension_numbers<[1], [0], [0], [1], [0, 0, 1, 1], [], []>} : vector<8x8xf32>, vector<8x32xf32>, vector<8x32xf32> -> vector<8x32xf32>
    %103 = arith.addf %83, %102 : vector<8x32xf32>
    %104 = vector.extract_strided_slice %38 {offsets = [0, 24], sizes = [8, 8], strides = [1, 1]} : vector<8x32xf32> to vector<8x8xf32>
    %105 = vector.extract_strided_slice %40 {offsets = [24, 0], sizes = [8, 8], strides = [1, 1]} : vector<32x8xf32> to vector<8x8xf32>
    %cst_36 = arith.constant dense<0.000000e+00> : vector<8x8xf32>
    %106 = tpu.matmul %104, %105, %cst_36 {dimension_numbers = #tpu.dot_dimension_numbers<[1], [0], [0], [1], [0, 0, 1, 1], [], []>} : vector<8x8xf32>, vector<8x8xf32>, vector<8x8xf32> -> vector<8x8xf32>
    %107 = vector.broadcast %42 : vector<1x8xf32> to vector<8x8xf32>
    %108 = arith.addf %106, %107 : vector<8x8xf32>
    %cst_37 = arith.constant dense<0xFF800000> : vector<8xf32>
    %109 = vector.multi_reduction <maximumf>, %108, %cst_37 [1] : vector<8x8xf32> to vector<8xf32>
    %110 = vector.shape_cast %109 : vector<8xf32> to vector<8x1xf32>
    %111 = vector.broadcast %110 : vector<8x1xf32> to vector<8x8xf32>
    %112 = arith.subf %108, %111 : vector<8x8xf32>
    %113 = math.exp %112 : vector<8x8xf32>
    %cst_38 = arith.constant dense<0.000000e+00> : vector<8xf32>
    %114 = vector.multi_reduction <add>, %113, %cst_38 [1] : vector<8x8xf32> to vector<8xf32>
    %115 = vector.shape_cast %114 : vector<8xf32> to vector<8x1xf32>
    %116 = tpu.reciprocal %115 {approx = true} : vector<8x1xf32> -> vector<8x1xf32>
    %117 = vector.broadcast %116 : vector<8x1xf32> to vector<8x8xf32>
    %118 = arith.mulf %113, %117 : vector<8x8xf32>
    %119 = vector.extract_strided_slice %41 {offsets = [0, 24], sizes = [8, 8], strides = [1, 1]} : vector<8x32xf32> to vector<8x8xf32>
    %cst_39 = arith.constant dense<0.000000e+00> : vector<8x8xf32>
    %120 = tpu.matmul %118, %119, %cst_39 {dimension_numbers = #tpu.dot_dimension_numbers<[1], [0], [0], [1], [0, 0, 1, 1], [], []>} : vector<8x8xf32>, vector<8x8xf32>, vector<8x8xf32> -> vector<8x8xf32>
    %121 = vector.extract_strided_slice %37 {offsets = [24, 0], sizes = [8, 32], strides = [1, 1]} : vector<32x32xf32> to vector<8x32xf32>
    %cst_40 = arith.constant dense<0.000000e+00> : vector<8x32xf32>
    %122 = tpu.matmul %120, %121, %cst_40 {dimension_numbers = #tpu.dot_dimension_numbers<[1], [0], [0], [1], [0, 0, 1, 1], [], []>} : vector<8x8xf32>, vector<8x32xf32>, vector<8x32xf32> -> vector<8x32xf32>
    %123 = arith.addf %103, %122 : vector<8x32xf32>
    %124 = vector.extract_strided_slice %34 {offsets = [8, 0], sizes = [8, 32], strides = [1, 1]} : vector<16x32xf32> to vector<8x32xf32>
    %125 = vector.extract_strided_slice %35 {offsets = [8, 0], sizes = [8, 32], strides = [1, 1]} : vector<16x32xf32> to vector<8x32xf32>
    %126 = tpu.transpose %125, [1, 0] : vector<8x32xf32> -> vector<32x8xf32>
    %127 = vector.extract_strided_slice %36 {offsets = [8, 0], sizes = [8, 32], strides = [1, 1]} : vector<16x32xf32> to vector<8x32xf32>
    %128 = vector.extract_strided_slice %9 {offsets = [0, 8], sizes = [1, 8], strides = [1, 1]} : vector<1x16xf32> to vector<1x8xf32>
    %cst_41 = arith.constant 0.000000e+00 : f32
    %129 = vector.broadcast %cst_41 : f32 to vector<8x32xf32>
    %130 = vector.extract_strided_slice %124 {offsets = [0, 0], sizes = [8, 8], strides = [1, 1]} : vector<8x32xf32> to vector<8x8xf32>
    %131 = vector.extract_strided_slice %126 {offsets = [0, 0], sizes = [8, 8], strides = [1, 1]} : vector<32x8xf32> to vector<8x8xf32>
    %cst_42 = arith.constant dense<0.000000e+00> : vector<8x8xf32>
    %132 = tpu.matmul %130, %131, %cst_42 {dimension_numbers = #tpu.dot_dimension_numbers<[1], [0], [0], [1], [0, 0, 1, 1], [], []>} : vector<8x8xf32>, vector<8x8xf32>, vector<8x8xf32> -> vector<8x8xf32>
    %133 = vector.broadcast %128 : vector<1x8xf32> to vector<8x8xf32>
    %134 = arith.addf %132, %133 : vector<8x8xf32>
    %cst_43 = arith.constant dense<0xFF800000> : vector<8xf32>
    %135 = vector.multi_reduction <maximumf>, %134, %cst_43 [1] : vector<8x8xf32> to vector<8xf32>
    %136 = vector.shape_cast %135 : vector<8xf32> to vector<8x1xf32>
    %137 = vector.broadcast %136 : vector<8x1xf32> to vector<8x8xf32>
    %138 = arith.subf %134, %137 : vector<8x8xf32>
    %139 = math.exp %138 : vector<8x8xf32>
    %cst_44 = arith.constant dense<0.000000e+00> : vector<8xf32>
    %140 = vector.multi_reduction <add>, %139, %cst_44 [1] : vector<8x8xf32> to vector<8xf32>
    %141 = vector.shape_cast %140 : vector<8xf32> to vector<8x1xf32>
    %142 = tpu.reciprocal %141 {approx = true} : vector<8x1xf32> -> vector<8x1xf32>
    %143 = vector.broadcast %142 : vector<8x1xf32> to vector<8x8xf32>
    %144 = arith.mulf %139, %143 : vector<8x8xf32>
    %145 = vector.extract_strided_slice %127 {offsets = [0, 0], sizes = [8, 8], strides = [1, 1]} : vector<8x32xf32> to vector<8x8xf32>
    %cst_45 = arith.constant dense<0.000000e+00> : vector<8x8xf32>
    %146 = tpu.matmul %144, %145, %cst_45 {dimension_numbers = #tpu.dot_dimension_numbers<[1], [0], [0], [1], [0, 0, 1, 1], [], []>} : vector<8x8xf32>, vector<8x8xf32>, vector<8x8xf32> -> vector<8x8xf32>
    %147 = vector.extract_strided_slice %37 {offsets = [0, 0], sizes = [8, 32], strides = [1, 1]} : vector<32x32xf32> to vector<8x32xf32>
    %cst_46 = arith.constant dense<0.000000e+00> : vector<8x32xf32>
    %148 = tpu.matmul %146, %147, %cst_46 {dimension_numbers = #tpu.dot_dimension_numbers<[1], [0], [0], [1], [0, 0, 1, 1], [], []>} : vector<8x8xf32>, vector<8x32xf32>, vector<8x32xf32> -> vector<8x32xf32>
    %149 = arith.addf %129, %148 : vector<8x32xf32>
    %150 = vector.extract_strided_slice %124 {offsets = [0, 8], sizes = [8, 8], strides = [1, 1]} : vector<8x32xf32> to vector<8x8xf32>
    %151 = vector.extract_strided_slice %126 {offsets = [8, 0], sizes = [8, 8], strides = [1, 1]} : vector<32x8xf32> to vector<8x8xf32>
    %cst_47 = arith.constant dense<0.000000e+00> : vector<8x8xf32>
    %152 = tpu.matmul %150, %151, %cst_47 {dimension_numbers = #tpu.dot_dimension_numbers<[1], [0], [0], [1], [0, 0, 1, 1], [], []>} : vector<8x8xf32>, vector<8x8xf32>, vector<8x8xf32> -> vector<8x8xf32>
    %153 = vector.broadcast %128 : vector<1x8xf32> to vector<8x8xf32>
    %154 = arith.addf %152, %153 : vector<8x8xf32>
    %cst_48 = arith.constant dense<0xFF800000> : vector<8xf32>
    %155 = vector.multi_reduction <maximumf>, %154, %cst_48 [1] : vector<8x8xf32> to vector<8xf32>
    %156 = vector.shape_cast %155 : vector<8xf32> to vector<8x1xf32>
    %157 = vector.broadcast %156 : vector<8x1xf32> to vector<8x8xf32>
    %158 = arith.subf %154, %157 : vector<8x8xf32>
    %159 = math.exp %158 : vector<8x8xf32>
    %cst_49 = arith.constant dense<0.000000e+00> : vector<8xf32>
    %160 = vector.multi_reduction <add>, %159, %cst_49 [1] : vector<8x8xf32> to vector<8xf32>
    %161 = vector.shape_cast %160 : vector<8xf32> to vector<8x1xf32>
    %162 = tpu.reciprocal %161 {approx = true} : vector<8x1xf32> -> vector<8x1xf32>
    %163 = vector.broadcast %162 : vector<8x1xf32> to vector<8x8xf32>
    %164 = arith.mulf %159, %163 : vector<8x8xf32>
    %165 = vector.extract_strided_slice %127 {offsets = [0, 8], sizes = [8, 8], strides = [1, 1]} : vector<8x32xf32> to vector<8x8xf32>
    %cst_50 = arith.constant dense<0.000000e+00> : vector<8x8xf32>
    %166 = tpu.matmul %164, %165, %cst_50 {dimension_numbers = #tpu.dot_dimension_numbers<[1], [0], [0], [1], [0, 0, 1, 1], [], []>} : vector<8x8xf32>, vector<8x8xf32>, vector<8x8xf32> -> vector<8x8xf32>
    %167 = vector.extract_strided_slice %37 {offsets = [8, 0], sizes = [8, 32], strides = [1, 1]} : vector<32x32xf32> to vector<8x32xf32>
    %cst_51 = arith.constant dense<0.000000e+00> : vector<8x32xf32>
    %168 = tpu.matmul %166, %167, %cst_51 {dimension_numbers = #tpu.dot_dimension_numbers<[1], [0], [0], [1], [0, 0, 1, 1], [], []>} : vector<8x8xf32>, vector<8x32xf32>, vector<8x32xf32> -> vector<8x32xf32>
    %169 = arith.addf %149, %168 : vector<8x32xf32>
    %170 = vector.extract_strided_slice %124 {offsets = [0, 16], sizes = [8, 8], strides = [1, 1]} : vector<8x32xf32> to vector<8x8xf32>
    %171 = vector.extract_strided_slice %126 {offsets = [16, 0], sizes = [8, 8], strides = [1, 1]} : vector<32x8xf32> to vector<8x8xf32>
    %cst_52 = arith.constant dense<0.000000e+00> : vector<8x8xf32>
    %172 = tpu.matmul %170, %171, %cst_52 {dimension_numbers = #tpu.dot_dimension_numbers<[1], [0], [0], [1], [0, 0, 1, 1], [], []>} : vector<8x8xf32>, vector<8x8xf32>, vector<8x8xf32> -> vector<8x8xf32>
    %173 = vector.broadcast %128 : vector<1x8xf32> to vector<8x8xf32>
    %174 = arith.addf %172, %173 : vector<8x8xf32>
    %cst_53 = arith.constant dense<0xFF800000> : vector<8xf32>
    %175 = vector.multi_reduction <maximumf>, %174, %cst_53 [1] : vector<8x8xf32> to vector<8xf32>
    %176 = vector.shape_cast %175 : vector<8xf32> to vector<8x1xf32>
    %177 = vector.broadcast %176 : vector<8x1xf32> to vector<8x8xf32>
    %178 = arith.subf %174, %177 : vector<8x8xf32>
    %179 = math.exp %178 : vector<8x8xf32>
    %cst_54 = arith.constant dense<0.000000e+00> : vector<8xf32>
    %180 = vector.multi_reduction <add>, %179, %cst_54 [1] : vector<8x8xf32> to vector<8xf32>
    %181 = vector.shape_cast %180 : vector<8xf32> to vector<8x1xf32>
    %182 = tpu.reciprocal %181 {approx = true} : vector<8x1xf32> -> vector<8x1xf32>
    %183 = vector.broadcast %182 : vector<8x1xf32> to vector<8x8xf32>
    %184 = arith.mulf %179, %183 : vector<8x8xf32>
    %185 = vector.extract_strided_slice %127 {offsets = [0, 16], sizes = [8, 8], strides = [1, 1]} : vector<8x32xf32> to vector<8x8xf32>
    %cst_55 = arith.constant dense<0.000000e+00> : vector<8x8xf32>
    %186 = tpu.matmul %184, %185, %cst_55 {dimension_numbers = #tpu.dot_dimension_numbers<[1], [0], [0], [1], [0, 0, 1, 1], [], []>} : vector<8x8xf32>, vector<8x8xf32>, vector<8x8xf32> -> vector<8x8xf32>
    %187 = vector.extract_strided_slice %37 {offsets = [16, 0], sizes = [8, 32], strides = [1, 1]} : vector<32x32xf32> to vector<8x32xf32>
    %cst_56 = arith.constant dense<0.000000e+00> : vector<8x32xf32>
    %188 = tpu.matmul %186, %187, %cst_56 {dimension_numbers = #tpu.dot_dimension_numbers<[1], [0], [0], [1], [0, 0, 1, 1], [], []>} : vector<8x8xf32>, vector<8x32xf32>, vector<8x32xf32> -> vector<8x32xf32>
    %189 = arith.addf %169, %188 : vector<8x32xf32>
    %190 = vector.extract_strided_slice %124 {offsets = [0, 24], sizes = [8, 8], strides = [1, 1]} : vector<8x32xf32> to vector<8x8xf32>
    %191 = vector.extract_strided_slice %126 {offsets = [24, 0], sizes = [8, 8], strides = [1, 1]} : vector<32x8xf32> to vector<8x8xf32>
    %cst_57 = arith.constant dense<0.000000e+00> : vector<8x8xf32>
    %192 = tpu.matmul %190, %191, %cst_57 {dimension_numbers = #tpu.dot_dimension_numbers<[1], [0], [0], [1], [0, 0, 1, 1], [], []>} : vector<8x8xf32>, vector<8x8xf32>, vector<8x8xf32> -> vector<8x8xf32>
    %193 = vector.broadcast %128 : vector<1x8xf32> to vector<8x8xf32>
    %194 = arith.addf %192, %193 : vector<8x8xf32>
    %cst_58 = arith.constant dense<0xFF800000> : vector<8xf32>
    %195 = vector.multi_reduction <maximumf>, %194, %cst_58 [1] : vector<8x8xf32> to vector<8xf32>
    %196 = vector.shape_cast %195 : vector<8xf32> to vector<8x1xf32>
    %197 = vector.broadcast %196 : vector<8x1xf32> to vector<8x8xf32>
    %198 = arith.subf %194, %197 : vector<8x8xf32>
    %199 = math.exp %198 : vector<8x8xf32>
    %cst_59 = arith.constant dense<0.000000e+00> : vector<8xf32>
    %200 = vector.multi_reduction <add>, %199, %cst_59 [1] : vector<8x8xf32> to vector<8xf32>
    %201 = vector.shape_cast %200 : vector<8xf32> to vector<8x1xf32>
    %202 = tpu.reciprocal %201 {approx = true} : vector<8x1xf32> -> vector<8x1xf32>
    %203 = vector.broadcast %202 : vector<8x1xf32> to vector<8x8xf32>
    %204 = arith.mulf %199, %203 : vector<8x8xf32>
    %205 = vector.extract_strided_slice %127 {offsets = [0, 24], sizes = [8, 8], strides = [1, 1]} : vector<8x32xf32> to vector<8x8xf32>
    %cst_60 = arith.constant dense<0.000000e+00> : vector<8x8xf32>
    %206 = tpu.matmul %204, %205, %cst_60 {dimension_numbers = #tpu.dot_dimension_numbers<[1], [0], [0], [1], [0, 0, 1, 1], [], []>} : vector<8x8xf32>, vector<8x8xf32>, vector<8x8xf32> -> vector<8x8xf32>
    %207 = vector.extract_strided_slice %37 {offsets = [24, 0], sizes = [8, 32], strides = [1, 1]} : vector<32x32xf32> to vector<8x32xf32>
    %cst_61 = arith.constant dense<0.000000e+00> : vector<8x32xf32>
    %208 = tpu.matmul %206, %207, %cst_61 {dimension_numbers = #tpu.dot_dimension_numbers<[1], [0], [0], [1], [0, 0, 1, 1], [], []>} : vector<8x8xf32>, vector<8x32xf32>, vector<8x32xf32> -> vector<8x32xf32>
    %209 = arith.addf %189, %208 : vector<8x32xf32>
    %210 = tpu.concatenate %123, %209 in 0 : vector<8x32xf32>, vector<8x32xf32> -> vector<16x32xf32>
    %211 = arith.addf %0, %210 : vector<16x32xf32>
    %212 = vector.broadcast %5 : vector<1x32xf32> to vector<16x32xf32>
    %213 = arith.addf %211, %212 : vector<16x32xf32>
    %cst_62 = arith.constant dense<0.000000e+00> : vector<16xf32>
    %214 = vector.multi_reduction <add>, %213, %cst_62 [1] : vector<16x32xf32> to vector<16xf32>
    %215 = vector.shape_cast %214 : vector<16xf32> to vector<16x1xf32>
    %cst_63 = arith.constant 3.200000e+01 : f32
    %216 = vector.broadcast %cst_63 : f32 to vector<16x1xf32>
    %217 = arith.divf %215, %216 : vector<16x1xf32>
    %218 = vector.broadcast %217 : vector<16x1xf32> to vector<16x32xf32>
    %219 = arith.subf %213, %218 : vector<16x32xf32>
    %220 = arith.mulf %219, %219 : vector<16x32xf32>
    %cst_64 = arith.constant dense<0.000000e+00> : vector<16xf32>
    %221 = vector.multi_reduction <add>, %220, %cst_64 [1] : vector<16x32xf32> to vector<16xf32>
    %222 = vector.shape_cast %221 : vector<16xf32> to vector<16x1xf32>
    %cst_65 = arith.constant 0.0322580636 : f32
    %223 = vector.broadcast %cst_65 : f32 to vector<16x1xf32>
    %224 = arith.mulf %222, %223 : vector<16x1xf32>
    %225 = math.sqrt %224 : vector<16x1xf32>
    %cst_66 = arith.constant 9.99999997E-7 : f32
    %226 = vector.broadcast %cst_66 : f32 to vector<16x1xf32>
    %227 = arith.addf %225, %226 : vector<16x1xf32>
    %228 = vector.broadcast %227 : vector<16x1xf32> to vector<16x32xf32>
    %229 = arith.divf %219, %228 : vector<16x32xf32>
    %230 = vector.broadcast %3 : vector<1x32xf32> to vector<16x32xf32>
    %231 = arith.mulf %230, %229 : vector<16x32xf32>
    %232 = vector.broadcast %4 : vector<1x32xf32> to vector<16x32xf32>
    %233 = arith.addf %231, %232 : vector<16x32xf32>
    %c0_67 = arith.constant 0 : index
    %c0_68 = arith.constant 0 : index
    %234 = vector.load %arg4[%c0_67, %c0_68] : memref<32x64xf32, #tpu.memory_space<vmem>>, vector<32x64xf32>
    %cst_69 = arith.constant dense<0.000000e+00> : vector<16x64xf32>
    %235 = tpu.matmul %233, %234, %cst_69 {dimension_numbers = #tpu.dot_dimension_numbers<[1], [0], [0], [1], [0, 0, 1, 1], [], []>} : vector<16x32xf32>, vector<32x64xf32>, vector<16x64xf32> -> vector<16x64xf32>
    %236 = vector.broadcast %7 : vector<1x64xf32> to vector<16x64xf32>
    %237 = arith.addf %235, %236 : vector<16x64xf32>
    %cst_70 = arith.constant 0.000000e+00 : f32
    %238 = vector.broadcast %cst_70 : f32 to vector<16x64xf32>
    %239 = arith.maximumf %237, %238 : vector<16x64xf32>
    %c0_71 = arith.constant 0 : index
    %c0_72 = arith.constant 0 : index
    %240 = vector.load %arg5[%c0_71, %c0_72] : memref<64x32xf32, #tpu.memory_space<vmem>>, vector<64x32xf32>
    %cst_73 = arith.constant dense<0.000000e+00> : vector<16x32xf32>
    %241 = tpu.matmul %239, %240, %cst_73 {dimension_numbers = #tpu.dot_dimension_numbers<[1], [0], [0], [1], [0, 0, 1, 1], [], []>} : vector<16x64xf32>, vector<64x32xf32>, vector<16x32xf32> -> vector<16x32xf32>
    %242 = vector.broadcast %6 : vector<1x32xf32> to vector<16x32xf32>
    %243 = arith.addf %241, %242 : vector<16x32xf32>
    %244 = arith.addf %213, %243 : vector<16x32xf32>
    %c0_74 = arith.constant 0 : index
    %c0_75 = arith.constant 0 : index
    %245 = vector.load %arg6[%c0_74, %c0_75] : memref<16x32xf32, #tpu.memory_space<vmem>>, vector<16x32xf32>
    tpu.vector_store %arg6[%c0_74, %c0_75], %244 {strides = array<i32>} : memref<16x32xf32, #tpu.memory_space<vmem>>, vector<16x32xf32>,
    return
  }
}

</mosaic_0001>

<llo_original>
// kernel: encoder_layer_forward.1
$region0: #{encoder_layer_forward.1}
  #allocation0 [shape = 'u32[]', space=smem, size = 0x4, offset = 0x4, fixed_abs, tag = 'smem constant byte address 0x4 - core index']
  #allocation1 [shape = 'u32[144,128]{1,0:T(1,128)}', space=vmem, size = 0x12000, scoped, tag = 'internal scratch']
  %s0 = inlined_call_operand.vmem [shape: f32[16,32], index: 0, kind: input, shape index: {}]
  %s1 = inlined_call_operand.vmem [shape: f32[9,128], index: 1, kind: input, shape index: {}]
  %s2 = inlined_call_operand.vmem [shape: f32[32,96], index: 2, kind: input, shape index: {}]
  %s3 = inlined_call_operand.vmem [shape: f32[32,32], index: 3, kind: input, shape index: {}]
  %s4 = inlined_call_operand.vmem [shape: f32[32,64], index: 4, kind: input, shape index: {}]
  %s5 = inlined_call_operand.vmem [shape: f32[64,32], index: 5, kind: input, shape index: {}]
  %s6 = inlined_call_operand.hbm [shape: f32[16,32], index: 6, kind: output, shape index: {}]
  %s7 = sld [smem:[#allocation0]]
  $region34: #{encoder_layer_forward.1} parent=0
    _
  %s9 = ssub.s32 1, %s7
  %s10 = scalar_select 0, %s9, %s7
  $region1: #{encoder_layer_forward.1} parent=0
    #allocation2 [shape = 'u8[8192]{0}', space=vmem, size = 0x2000, scoped, tag = 'output window, operand 0, single buffered']
    #allocation3 [shape = 's32[1]{0}', space=sflag, size = 0x4, scoped, tag = 'scoped memory for encoder_layer_forward.1']
    %11 = vsyncpa [#allocation3], 0
    // Predicated region
    $region2: #{encoder_layer_forward.1} parent=1 // pred_check
      _
    $region3: #{encoder_layer_forward.1} parent=1 // pred_check_branch
      %13 = sbr.rel (0) target = $region5
    $region4: #{encoder_layer_forward.1} parent=1 // pred_region
      _
    $region5: #{encoder_layer_forward.1} parent=1 // pred_fallthru
      _
    // Predicated region
    $region6: #{encoder_layer_forward.1} parent=1 // pred_check
      _
    $region7: #{encoder_layer_forward.1} parent=1 // pred_check_branch
      %15 = sbr.rel (0) target = $region9
    $region8: #{encoder_layer_forward.1} parent=1 // pred_region
      _
    $region9: #{encoder_layer_forward.1} parent=1 // pred_fallthru
      _
    // Predicated region
    $region10: #{encoder_layer_forward.1} parent=1 // pred_check
      _
    $region11: #{encoder_layer_forward.1} parent=1 // pred_check_branch
      %17 = sbr.rel (0) target = $region13
    $region12: #{encoder_layer_forward.1} parent=1 // pred_region
      _
    $region13: #{encoder_layer_forward.1} parent=1 // pred_fallthru
      _
    // Predicated region
    $region14: #{encoder_layer_forward.1} parent=1 // pred_check
      _
    $region15: #{encoder_layer_forward.1} parent=1 // pred_check_branch
      %19 = sbr.rel (0) target = $region17
    $region16: #{encoder_layer_forward.1} parent=1 // pred_region
      _
    $region17: #{encoder_layer_forward.1} parent=1 // pred_fallthru
      _
    // Predicated region
    $region18: #{encoder_layer_forward.1} parent=1 // pred_check
      _
    $region19: #{encoder_layer_forward.1} parent=1 // pred_check_branch
      %21 = sbr.rel (0) target = $region21
    $region20: #{encoder_layer_forward.1} parent=1 // pred_region
      _
    $region21: #{encoder_layer_forward.1} parent=1 // pred_fallthru
      _
    // Predicated region
    $region22: #{encoder_layer_forward.1} parent=1 // pred_check
      _
    $region23: #{encoder_layer_forward.1} parent=1 // pred_check_branch
      %23 = sbr.rel (0) target = $region25
    $region24: #{encoder_layer_forward.1} parent=1 // pred_region
      _
    $region25: #{encoder_layer_forward.1} parent=1 // pred_fallthru
      _
    %v24 = vld [vmem:[%s0] sm:$0xff]
    %v25 = vld [vmem:[%s0 + $0x8] sm:$0xff]
    %v26 = vld [vmem:[%s1] sm:$0x1]
    %v27 = vld [vmem:[%s1 + $0x1] sm:$0x1]
    %v28 = vld [vmem:[%s1 + $0x2] sm:$0x1]
    %v29 = vld [vmem:[%s1 + $0x3] sm:$0x1]
    %v30 = vld [vmem:[%s1 + $0x4] sm:$0x1]
    %v31 = vld [vmem:[%s1 + $0x5] sm:$0x1]
    %v32 = vld [vmem:[%s1 + $0x6] sm:$0x1]
    %v33 = vld [vmem:[%s1 + $0x7] sm:$0x1]
    %v34 = vld [vmem:[%s1 + $0x8] sm:$0x1]
    %vm35 = vcmask 261120
    %v36 = vsel %vm35, %v24, 0.0
    %37 = vadd.xlane.f32.xlu0 %v36
    %v38 = vpop.xlane.xlu0 %37
    %v39 = vsel %vm35, %v25, 0.0
    %40 = vadd.xlane.f32.xlu0 %v39
    %v41 = vpop.xlane.xlu0 %40
    %v42 = vrcp.pop 32.0
    %v43 = vmul.f32 %v38, %v42
    %v44 = vmul.f32 %v41, %v42
    %v45 = vsub.f32 %v24, %v43
    %v46 = vsub.f32 %v25, %v44
    %v47 = vmul.f32 %v45, %v45
    %v48 = vmul.f32 %v46, %v46
    %v49 = vsel %vm35, %v47, 0.0
    %50 = vadd.xlane.f32.xlu0 %v49
    %v51 = vpop.xlane.xlu0 %50
    %v52 = vsel %vm35, %v48, 0.0
    %53 = vadd.xlane.f32.xlu0 %v52
    %v54 = vpop.xlane.xlu0 %53
    %v55 = vmul.f32 %v51, 0.032258064
    %v56 = vmul.f32 %v54, 0.032258064
    %v57 = vrsqrt.pop %v55
    %v58 = vmul.f32 %v55, %v57
    %vm59 = vcmp.eq.f32.partialorder %v55, inf
    %v60 = vsel %vm59, %v55, %v58
    %vm61 = vcmp.eq.f32.partialorder %v55, 0.0
    %v62 = vand.u32 %v55, 2147483648
    %v63 = vsel %vm61, %v62, %v60
    %v64 = vrsqrt.pop %v56
    %v65 = vmul.f32 %v56, %v64
    %vm66 = vcmp.eq.f32.partialorder %v56, inf
    %v67 = vsel %vm66, %v56, %v65
    %vm68 = vcmp.eq.f32.partialorder %v56, 0.0
    %v69 = vand.u32 %v56, 2147483648
    %v70 = vsel %vm68, %v69, %v67
    %v71 = vadd.f32 %v63, 1e-06
    %v72 = vadd.f32 %v70, 1e-06
    %v73 = vrcp.pop %v71
    %v74 = vmul.f32 %v45, %v73
    %v75 = vrcp.pop %v72
    %v76 = vmul.f32 %v46, %v75
    %v77 = vlaneseq
    %v78 = vshrl.u32 %v77, 7
    %v79 = vsub.s32 0, %v78
    %v80 = vrot.slane %v26, %v79
    %v81 = vmul.f32 %v80, %v74
    %v82 = vmul.f32 %v80, %v76
    %v83 = vlaneseq
    %v84 = vshrl.u32 %v83, 7
    %v85 = vsub.s32 0, %v84
    %v86 = vrot.slane %v27, %v85
    %v87 = vadd.f32 %v81, %v86
    %v88 = vadd.f32 %v82, %v86
    %v89 = vld [vmem:[%s2] sm:$0xff]
    %v90 = vld [vmem:[%s2 + $0x8] sm:$0xff]
    %v91 = vld [vmem:[%s2 + $0x10] sm:$0xff]
    %v92 = vld [vmem:[%s2 + $0x18] sm:$0xff]
    %v93 = vlaneseq
    %v94 = vshrl.u32 %v93, 7
    %v95 = vsub.s32 0, %v94
    %v96 = vrot.slane %v33, %v95
    %v98 = vsel %vm35, %v87, 0
    %v101 = vsel %vm35, %v88, 0
    %103 = vmatprep.subr.mxu0 0.0
    %104 = vmatpush1.msra.mxu0 0.0
    %105 = vmatprep.subr.mxu0 0.0
    %106 = vmatpush1.msra.mxu0 0.0
    %107 = vmatprep.subr.mxu0 0.0
    %108 = vmatpush1.msra.mxu0 0.0
    %109 = vmatprep.subr.mxu0 0.0
    %110 = vmatpush1.msra.mxu0 0.0
    %111 = vmatprep.subr.mxu0 0.0
    %112 = vmatpush1.msra.mxu0 0.0
    %113 = vmatprep.subr.mxu0 0.0
    %114 = vmatpush1.msra.mxu0 0.0
    %115 = vmatprep.subr.mxu0 0.0
    %116 = vmatpush1.msra.mxu0 0.0
    %117 = vmatprep.subr.mxu0 0.0
    %118 = vmatpush1.msra.mxu0 0.0
    %119 = vmatprep.subr.mxu0 0.0
    %120 = vmatpush1.msra.mxu0 0.0
    %121 = vmatprep.subr.mxu0 0.0
    %122 = vmatpush1.msra.mxu0 0.0
    %123 = vmatprep.subr.mxu0 0.0
    %124 = vmatpush1.msra.mxu0 0.0
    %125 = vmatprep.subr.mxu0 0.0
    %126 = vmatpush1.msra.mxu0 0.0
    %127 = vmatprep.subr.mxu0 0.0
    %128 = vmatpush1.msra.mxu0 %v92
    %129 = vmatprep.subr.mxu0 0.0
    %130 = vmatpush1.msra.mxu0 %v91
    %131 = vmatprep.subr.mxu0 0.0
    %132 = vmatpush1.msra.mxu0 %v90
    %133 = vmatprep.subr.mxu0 0.0
    %134 = vmatpush1.msra.mxu0 %v89
    %135 = vmatprep.subr.mxu0 0.0
    %136 = vmatpush2.msra.mxu0 0.0
    %137 = vmatprep.subr.mxu0 0.0
    %138 = vmatpush2.msra.mxu0 0.0
    %139 = vmatprep.subr.mxu0 0.0
    %140 = vmatpush2.msra.mxu0 0.0
    %141 = vmatprep.subr.mxu0 0.0
    %142 = vmatpush2.msra.mxu0 0.0
    %143 = vmatprep.subr.mxu0 0.0
    %144 = vmatpush2.msra.mxu0 0.0
    %145 = vmatprep.subr.mxu0 0.0
    %146 = vmatpush2.msra.mxu0 0.0
    %147 = vmatprep.subr.mxu0 0.0
    %148 = vmatpush2.msra.mxu0 0.0
    %149 = vmatprep.subr.mxu0 0.0
    %150 = vmatpush2.msra.mxu0 0.0
    %151 = vmatprep.subr.mxu0 0.0
    %152 = vmatpush2.msra.mxu0 0.0
    %153 = vmatprep.subr.mxu0 0.0
    %154 = vmatpush2.msra.mxu0 0.0
    %155 = vmatprep.subr.mxu0 0.0
    %156 = vmatpush2.msra.mxu0 0.0
    %157 = vmatprep.subr.mxu0 0.0
    %158 = vmatpush2.msra.mxu0 0.0
    %159 = vmatprep.subr.mxu0 0.0
    %160 = vmatpush2.msra.mxu0 0.0
    %161 = vmatprep.subr.mxu0 0.0
    %162 = vmatpush2.msra.mxu0 0.0
    %163 = vmatprep.subr.mxu0 0.0
    %164 = vmatpush2.msra.mxu0 0.0
    %165 = vmatprep.subr.mxu0 0.0
    %166 = vmatpush2.msra.mxu0 0.0
    %167 = vmatprep.mubr.f32.mxu0 0.0
    %168 = vmatmul.mubr.f32.gmra.mxu0 %v98
    %v169 = vpop.f32.mrf.mxu0
    %v170 = vadd.f32 %v96, %v169
    %v171 = vpop.f32.mrf.mxu0
    %172 = vmatprep.mubr.f32.mxu0 0.0
    %173 = vmatmul.mubr.f32.gmra.mxu0 %v101
    %v174 = vpop.f32.mrf.mxu0
    %v175 = vadd.f32 %v96, %v174
    %v176 = vpop.f32.mrf.mxu0
    %177 = vdwg.mxu0
    %v178 = vld [vmem:[%s3] sm:$0xff]
    %v179 = vld [vmem:[%s3 + $0x8] sm:$0xff]
    %v180 = vld [vmem:[%s3 + $0x10] sm:$0xff]
    %v181 = vld [vmem:[%s3 + $0x18] sm:$0xff]
    %v182 = vlaneseq
    %v183 = vshrl.u32 %v182, 7
    %v184 = vsub.s32 0, %v183
    %v185 = vrot.slane %v34, %v184
    %187 = vrot.lane.b32.xlu0 %v170, 96
    %v188 = vpop.permute.xlu0 %187
    %vm189 = vcmask 64512
    %v190 = vsel %vm189, %v170, 0
    %v192 = vsel %vm189, %v188, 0
    %194 = vmatprep.subr.mxu0 0.0
    %195 = vmatpush1.xpose.msra.mxu0 0.0
    %196 = vmatprep.subr.mxu0 0.0
    %197 = vmatpush1.xpose.msra.mxu0 0.0
    %198 = vmatprep.subr.mxu0 0.0
    %199 = vmatpush1.xpose.msra.mxu0 0.0
    %200 = vmatprep.subr.mxu0 0.0
    %201 = vmatpush1.xpose.msra.mxu0 0.0
    %202 = vmatprep.subr.mxu0 0.0
    %203 = vmatpush1.xpose.msra.mxu0 0.0
    %204 = vmatprep.subr.mxu0 0.0
    %205 = vmatpush1.xpose.msra.mxu0 0.0
    %206 = vmatprep.subr.mxu0 0.0
    %207 = vmatpush1.xpose.msra.mxu0 0.0
    %208 = vmatprep.subr.mxu0 0.0
    %209 = vmatpush1.xpose.msra.mxu0 0.0
    %210 = vmatprep.subr.mxu0 0.0
    %211 = vmatpush1.xpose.msra.mxu0 0.0
    %212 = vmatprep.subr.mxu0 0.0
    %213 = vmatpush1.xpose.msra.mxu0 0.0
    %214 = vmatprep.subr.mxu0 0.0
    %215 = vmatpush1.xpose.msra.mxu0 0.0
    %216 = vmatprep.subr.mxu0 0.0
    %217 = vmatpush1.xpose.msra.mxu0 0.0
    %218 = vmatprep.subr.mxu0 0.0
    %219 = vmatpush1.xpose.msra.mxu0 0.0
    %220 = vmatprep.subr.mxu0 0.0
    %221 = vmatpush1.xpose.msra.mxu0 0.0
    %222 = vmatprep.subr.mxu0 0.0
    %223 = vmatpush1.xpose.msra.mxu0 0.0
    %224 = vmatprep.subr.mxu0 0.0
    %225 = vmatpush1.xpose.msra.mxu0 %v192
    %226 = vmatprep.subr.mxu0 0.0
    %227 = vmatpush2.xpose.msra.mxu0 0.0
    %228 = vmatprep.subr.mxu0 0.0
    %229 = vmatpush2.xpose.msra.mxu0 0.0
    %230 = vmatprep.subr.mxu0 0.0
    %231 = vmatpush2.xpose.msra.mxu0 0.0
    %232 = vmatprep.subr.mxu0 0.0
    %233 = vmatpush2.xpose.msra.mxu0 0.0
    %234 = vmatprep.subr.mxu0 0.0
    %235 = vmatpush2.xpose.msra.mxu0 0.0
    %236 = vmatprep.subr.mxu0 0.0
    %237 = vmatpush2.xpose.msra.mxu0 0.0
    %238 = vmatprep.subr.mxu0 0.0
    %239 = vmatpush2.xpose.msra.mxu0 0.0
    %240 = vmatprep.subr.mxu0 0.0
    %241 = vmatpush2.xpose.msra.mxu0 0.0
    %242 = vmatprep.subr.mxu0 0.0
    %243 = vmatpush2.xpose.msra.mxu0 0.0
    %244 = vmatprep.subr.mxu0 0.0
    %245 = vmatpush2.xpose.msra.mxu0 0.0
    %246 = vmatprep.subr.mxu0 0.0
    %247 = vmatpush2.xpose.msra.mxu0 0.0
    %248 = vmatprep.subr.mxu0 0.0
    %249 = vmatpush2.xpose.msra.mxu0 0.0
    %250 = vmatprep.subr.mxu0 0.0
    %251 = vmatpush2.xpose.msra.mxu0 0.0
    %252 = vmatprep.subr.mxu0 0.0
    %253 = vmatpush2.xpose.msra.mxu0 0.0
    %254 = vmatprep.subr.mxu0 0.0
    %255 = vmatpush2.xpose.msra.mxu0 0.0
    %256 = vmatprep.subr.mxu0 0.0
    %257 = vmatpush2.xpose.msra.mxu0 0.0
    %258 = vmatprep.mubr.f32.mxu0 0.0
    %259 = vmatmul.mubr.f32.gmra.mxu0 %v190
    %v260 = vpop.f32.mrf.mxu0
    %v261 = vadd.f32 %v185, %v260
    %v262 = vpop.f32.mrf.mxu0
    %263 = vdwg.mxu0
    %v264 = vsel %vm189, %v261, -inf
    %265 = vmax.xlane.f32.xlu0 %v264
    %v266 = vpop.xlane.xlu0 %265
    %v267 = vsub.f32 %v261, %v266
    %v268 = vmul.f32 %v267, 1.442695
    %v269 = vpow.pop %v268
    %v270 = vsel %vm189, %v269, 0.0
    %271 = vadd.xlane.f32.xlu0 %v270
    %v272 = vpop.xlane.xlu0 %271
    %v273 = vrcp.pop %v272
    %v274 = vmul.f32 %v269, %v273
    %275 = vrot.lane.b32.xlu0 %v170, 64
    %v276 = vpop.permute.xlu0 %275
    %v279 = vsel %vm189, %v274, 0
    %281 = vmatprep.subr.mxu0 0.0
    %282 = vmatpush1.msra.mxu0 0.0
    %283 = vmatprep.subr.mxu0 0.0
    %284 = vmatpush1.msra.mxu0 0.0
    %285 = vmatprep.subr.mxu0 0.0
    %286 = vmatpush1.msra.mxu0 0.0
    %287 = vmatprep.subr.mxu0 0.0
    %288 = vmatpush1.msra.mxu0 0.0
    %289 = vmatprep.subr.mxu0 0.0
    %290 = vmatpush1.msra.mxu0 0.0
    %291 = vmatprep.subr.mxu0 0.0
    %292 = vmatpush1.msra.mxu0 0.0
    %293 = vmatprep.subr.mxu0 0.0
    %294 = vmatpush1.msra.mxu0 0.0
    %295 = vmatprep.subr.mxu0 0.0
    %296 = vmatpush1.msra.mxu0 0.0
    %297 = vmatprep.subr.mxu0 0.0
    %298 = vmatpush1.msra.mxu0 0.0
    %299 = vmatprep.subr.mxu0 0.0
    %300 = vmatpush1.msra.mxu0 0.0
    %301 = vmatprep.subr.mxu0 0.0
    %302 = vmatpush1.msra.mxu0 0.0
    %303 = vmatprep.subr.mxu0 0.0
    %304 = vmatpush1.msra.mxu0 0.0
    %305 = vmatprep.subr.mxu0 0.0
    %306 = vmatpush1.msra.mxu0 0.0
    %307 = vmatprep.subr.mxu0 0.0
    %308 = vmatpush1.msra.mxu0 0.0
    %309 = vmatprep.subr.mxu0 0.0
    %310 = vmatpush1.msra.mxu0 0.0
    %311 = vmatprep.subr.mxu0 0.0
    %312 = vmatpush1.msra.mxu0 %v276
    %313 = vmatprep.subr.mxu0 0.0
    %314 = vmatpush2.msra.mxu0 0.0
    %315 = vmatprep.subr.mxu0 0.0
    %316 = vmatpush2.msra.mxu0 0.0
    %317 = vmatprep.subr.mxu0 0.0
    %318 = vmatpush2.msra.mxu0 0.0
    %319 = vmatprep.subr.mxu0 0.0
    %320 = vmatpush2.msra.mxu0 0.0
    %321 = vmatprep.subr.mxu0 0.0
    %322 = vmatpush2.msra.mxu0 0.0
    %323 = vmatprep.subr.mxu0 0.0
    %324 = vmatpush2.msra.mxu0 0.0
    %325 = vmatprep.subr.mxu0 0.0
    %326 = vmatpush2.msra.mxu0 0.0
    %327 = vmatprep.subr.mxu0 0.0
    %328 = vmatpush2.msra.mxu0 0.0
    %329 = vmatprep.subr.mxu0 0.0
    %330 = vmatpush2.msra.mxu0 0.0
    %331 = vmatprep.subr.mxu0 0.0
    %332 = vmatpush2.msra.mxu0 0.0
    %333 = vmatprep.subr.mxu0 0.0
    %334 = vmatpush2.msra.mxu0 0.0
    %335 = vmatprep.subr.mxu0 0.0
    %336 = vmatpush2.msra.mxu0 0.0
    %337 = vmatprep.subr.mxu0 0.0
    %338 = vmatpush2.msra.mxu0 0.0
    %339 = vmatprep.subr.mxu0 0.0
    %340 = vmatpush2.msra.mxu0 0.0
    %341 = vmatprep.subr.mxu0 0.0
    %342 = vmatpush2.msra.mxu0 0.0
    %343 = vmatprep.subr.mxu0 0.0
    %344 = vmatpush2.msra.mxu0 0.0
    %345 = vmatprep.mubr.f32.mxu0 0.0
    %346 = vmatmul.mubr.f32.gmra.mxu0 %v279
    %v347 = vpop.f32.mrf.mxu0
    %v348 = vadd.f32 0.0, %v347
    %v349 = vpop.f32.mrf.mxu0
    %350 = vdwg.mxu0
    %351 = vrot.lane.b32.xlu0 %v170, 120
    %v352 = vpop.permute.xlu0 %351
    %353 = vrot.lane.b32.xlu0 %v170, 88
    %v354 = vpop.permute.xlu0 %353
    %v355 = vsel %vm189, %v352, 0
    %v357 = vsel %vm189, %v354, 0
    %359 = vmatprep.subr.mxu0 0.0
    %360 = vmatpush1.xpose.msra.mxu0 0.0
    %361 = vmatprep.subr.mxu0 0.0
    %362 = vmatpush1.xpose.msra.mxu0 0.0
    %363 = vmatprep.subr.mxu0 0.0
    %364 = vmatpush1.xpose.msra.mxu0 0.0
    %365 = vmatprep.subr.mxu0 0.0
    %366 = vmatpush1.xpose.msra.mxu0 0.0
    %367 = vmatprep.subr.mxu0 0.0
    %368 = vmatpush1.xpose.msra.mxu0 0.0
    %369 = vmatprep.subr.mxu0 0.0
    %370 = vmatpush1.xpose.msra.mxu0 0.0
    %371 = vmatprep.subr.mxu0 0.0
    %372 = vmatpush1.xpose.msra.mxu0 0.0
    %373 = vmatprep.subr.mxu0 0.0
    %374 = vmatpush1.xpose.msra.mxu0 0.0
    %375 = vmatprep.subr.mxu0 0.0
    %376 = vmatpush1.xpose.msra.mxu0 0.0
    %377 = vmatprep.subr.mxu0 0.0
    %378 = vmatpush1.xpose.msra.mxu0 0.0
    %379 = vmatprep.subr.mxu0 0.0
    %380 = vmatpush1.xpose.msra.mxu0 0.0
    %381 = vmatprep.subr.mxu0 0.0
    %382 = vmatpush1.xpose.msra.mxu0 0.0
    %383 = vmatprep.subr.mxu0 0.0
    %384 = vmatpush1.xpose.msra.mxu0 0.0
    %385 = vmatprep.subr.mxu0 0.0
    %386 = vmatpush1.xpose.msra.mxu0 0.0
    %387 = vmatprep.subr.mxu0 0.0
    %388 = vmatpush1.xpose.msra.mxu0 0.0
    %389 = vmatprep.subr.mxu0 0.0
    %390 = vmatpush1.xpose.msra.mxu0 %v357
    %391 = vmatprep.subr.mxu0 0.0
    %392 = vmatpush2.xpose.msra.mxu0 0.0
    %393 = vmatprep.subr.mxu0 0.0
    %394 = vmatpush2.xpose.msra.mxu0 0.0
    %395 = vmatprep.subr.mxu0 0.0
    %396 = vmatpush2.xpose.msra.mxu0 0.0
    %397 = vmatprep.subr.mxu0 0.0
    %398 = vmatpush2.xpose.msra.mxu0 0.0
    %399 = vmatprep.subr.mxu0 0.0
    %400 = vmatpush2.xpose.msra.mxu0 0.0
    %401 = vmatprep.subr.mxu0 0.0
    %402 = vmatpush2.xpose.msra.mxu0 0.0
    %403 = vmatprep.subr.mxu0 0.0
    %404 = vmatpush2.xpose.msra.mxu0 0.0
    %405 = vmatprep.subr.mxu0 0.0
    %406 = vmatpush2.xpose.msra.mxu0 0.0
    %407 = vmatprep.subr.mxu0 0.0
    %408 = vmatpush2.xpose.msra.mxu0 0.0
    %409 = vmatprep.subr.mxu0 0.0
    %410 = vmatpush2.xpose.msra.mxu0 0.0
    %411 = vmatprep.subr.mxu0 0.0
    %412 = vmatpush2.xpose.msra.mxu0 0.0
    %413 = vmatprep.subr.mxu0 0.0
    %414 = vmatpush2.xpose.msra.mxu0 0.0
    %415 = vmatprep.subr.mxu0 0.0
    %416 = vmatpush2.xpose.msra.mxu0 0.0
    %417 = vmatprep.subr.mxu0 0.0
    %418 = vmatpush2.xpose.msra.mxu0 0.0
    %419 = vmatprep.subr.mxu0 0.0
    %420 = vmatpush2.xpose.msra.mxu0 0.0
    %421 = vmatprep.subr.mxu0 0.0
    %422 = vmatpush2.xpose.msra.mxu0 0.0
    %423 = vmatprep.mubr.f32.mxu0 0.0
    %424 = vmatmul.mubr.f32.gmra.mxu0 %v355
    %v425 = vpop.f32.mrf.mxu0
    %v426 = vadd.f32 %v185, %v425
    %v427 = vpop.f32.mrf.mxu0
    %428 = vdwg.mxu0
    %v429 = vsel %vm189, %v426, -inf
    %430 = vmax.xlane.f32.xlu0 %v429
    %v431 = vpop.xlane.xlu0 %430
    %v432 = vsub.f32 %v426, %v431
    %v433 = vmul.f32 %v432, 1.442695
    %v434 = vpow.pop %v433
    %v435 = vsel %vm189, %v434, 0.0
    %436 = vadd.xlane.f32.xlu0 %v435
    %v437 = vpop.xlane.xlu0 %436
    %v438 = vrcp.pop %v437
    %v439 = vmul.f32 %v434, %v438
    %440 = vrot.lane.b32.xlu0 %v170, 56
    %v441 = vpop.permute.xlu0 %440
    %v444 = vsel %vm189, %v439, 0
    %446 = vmatprep.subr.mxu0 0.0
    %447 = vmatpush1.msra.mxu0 0.0
    %448 = vmatprep.subr.mxu0 0.0
    %449 = vmatpush1.msra.mxu0 0.0
    %450 = vmatprep.subr.mxu0 0.0
    %451 = vmatpush1.msra.mxu0 0.0
    %452 = vmatprep.subr.mxu0 0.0
    %453 = vmatpush1.msra.mxu0 0.0
    %454 = vmatprep.subr.mxu0 0.0
    %455 = vmatpush1.msra.mxu0 0.0
    %456 = vmatprep.subr.mxu0 0.0
    %457 = vmatpush1.msra.mxu0 0.0
    %458 = vmatprep.subr.mxu0 0.0
    %459 = vmatpush1.msra.mxu0 0.0
    %460 = vmatprep.subr.mxu0 0.0
    %461 = vmatpush1.msra.mxu0 0.0
    %462 = vmatprep.subr.mxu0 0.0
    %463 = vmatpush1.msra.mxu0 0.0
    %464 = vmatprep.subr.mxu0 0.0
    %465 = vmatpush1.msra.mxu0 0.0
    %466 = vmatprep.subr.mxu0 0.0
    %467 = vmatpush1.msra.mxu0 0.0
    %468 = vmatprep.subr.mxu0 0.0
    %469 = vmatpush1.msra.mxu0 0.0
    %470 = vmatprep.subr.mxu0 0.0
    %471 = vmatpush1.msra.mxu0 0.0
    %472 = vmatprep.subr.mxu0 0.0
    %473 = vmatpush1.msra.mxu0 0.0
    %474 = vmatprep.subr.mxu0 0.0
    %475 = vmatpush1.msra.mxu0 0.0
    %476 = vmatprep.subr.mxu0 0.0
    %477 = vmatpush1.msra.mxu0 %v441
    %478 = vmatprep.subr.mxu0 0.0
    %479 = vmatpush2.msra.mxu0 0.0
    %480 = vmatprep.subr.mxu0 0.0
    %481 = vmatpush2.msra.mxu0 0.0
    %482 = vmatprep.subr.mxu0 0.0
    %483 = vmatpush2.msra.mxu0 0.0
    %484 = vmatprep.subr.mxu0 0.0
    %485 = vmatpush2.msra.mxu0 0.0
    %486 = vmatprep.subr.mxu0 0.0
    %487 = vmatpush2.msra.mxu0 0.0
    %488 = vmatprep.subr.mxu0 0.0
    %489 = vmatpush2.msra.mxu0 0.0
    %490 = vmatprep.subr.mxu0 0.0
    %491 = vmatpush2.msra.mxu0 0.0
    %492 = vmatprep.subr.mxu0 0.0
    %493 = vmatpush2.msra.mxu0 0.0
    %494 = vmatprep.subr.mxu0 0.0
    %495 = vmatpush2.msra.mxu0 0.0
    %496 = vmatprep.subr.mxu0 0.0
    %497 = vmatpush2.msra.mxu0 0.0
    %498 = vmatprep.subr.mxu0 0.0
    %499 = vmatpush2.msra.mxu0 0.0
    %500 = vmatprep.subr.mxu0 0.0
    %501 = vmatpush2.msra.mxu0 0.0
    %502 = vmatprep.subr.mxu0 0.0
    %503 = vmatpush2.msra.mxu0 0.0
    %504 = vmatprep.subr.mxu0 0.0
    %505 = vmatpush2.msra.mxu0 0.0
    %506 = vmatprep.subr.mxu0 0.0
    %507 = vmatpush2.msra.mxu0 0.0
    %508 = vmatprep.subr.mxu0 0.0
    %509 = vmatpush2.msra.mxu0 0.0
    %510 = vmatprep.mubr.f32.mxu0 0.0
    %511 = vmatmul.mubr.f32.gmra.mxu0 %v444
    %v512 = vpop.f32.mrf.mxu0
    %v513 = vadd.f32 0.0, %v512
    %v514 = vpop.f32.mrf.mxu0
    %515 = vdwg.mxu0
    %v517 = vsel %vm189, %v513, 0
    %519 = vmatprep.subr.mxu0 0.0
    %520 = vmatpush1.msra.mxu0 0.0
    %521 = vmatprep.subr.mxu0 0.0
    %522 = vmatpush1.msra.mxu0 0.0
    %523 = vmatprep.subr.mxu0 0.0
    %524 = vmatpush1.msra.mxu0 0.0
    %525 = vmatprep.subr.mxu0 0.0
    %526 = vmatpush1.msra.mxu0 0.0
    %527 = vmatprep.subr.mxu0 0.0
    %528 = vmatpush1.msra.mxu0 0.0
    %529 = vmatprep.subr.mxu0 0.0
    %530 = vmatpush1.msra.mxu0 0.0
    %531 = vmatprep.subr.mxu0 0.0
    %532 = vmatpush1.msra.mxu0 0.0
    %533 = vmatprep.subr.mxu0 0.0
    %534 = vmatpush1.msra.mxu0 0.0
    %535 = vmatprep.subr.mxu0 0.0
    %536 = vmatpush1.msra.mxu0 0.0
    %537 = vmatprep.subr.mxu0 0.0
    %538 = vmatpush1.msra.mxu0 0.0
    %539 = vmatprep.subr.mxu0 0.0
    %540 = vmatpush1.msra.mxu0 0.0
    %541 = vmatprep.subr.mxu0 0.0
    %542 = vmatpush1.msra.mxu0 0.0
    %543 = vmatprep.subr.mxu0 0.0
    %544 = vmatpush1.msra.mxu0 0.0
    %545 = vmatprep.subr.mxu0 0.0
    %546 = vmatpush1.msra.mxu0 0.0
    %547 = vmatprep.subr.mxu0 0.0
    %548 = vmatpush1.msra.mxu0 0.0
    %549 = vmatprep.subr.mxu0 0.0
    %550 = vmatpush1.msra.mxu0 %v179
    %551 = vmatprep.subr.mxu0 0.0
    %552 = vmatpush2.msra.mxu0 0.0
    %553 = vmatprep.subr.mxu0 0.0
    %554 = vmatpush2.msra.mxu0 0.0
    %555 = vmatprep.subr.mxu0 0.0
    %556 = vmatpush2.msra.mxu0 0.0
    %557 = vmatprep.subr.mxu0 0.0
    %558 = vmatpush2.msra.mxu0 0.0
    %559 = vmatprep.subr.mxu0 0.0
    %560 = vmatpush2.msra.mxu0 0.0
    %561 = vmatprep.subr.mxu0 0.0
    %562 = vmatpush2.msra.mxu0 0.0
    %563 = vmatprep.subr.mxu0 0.0
    %564 = vmatpush2.msra.mxu0 0.0
    %565 = vmatprep.subr.mxu0 0.0
    %566 = vmatpush2.msra.mxu0 0.0
    %567 = vmatprep.subr.mxu0 0.0
    %568 = vmatpush2.msra.mxu0 0.0
    %569 = vmatprep.subr.mxu0 0.0
    %570 = vmatpush2.msra.mxu0 0.0
    %571 = vmatprep.subr.mxu0 0.0
    %572 = vmatpush2.msra.mxu0 0.0
    %573 = vmatprep.subr.mxu0 0.0
    %574 = vmatpush2.msra.mxu0 0.0
    %575 = vmatprep.subr.mxu0 0.0
    %576 = vmatpush2.msra.mxu0 0.0
    %577 = vmatprep.subr.mxu0 0.0
    %578 = vmatpush2.msra.mxu0 0.0
    %579 = vmatprep.subr.mxu0 0.0
    %580 = vmatpush2.msra.mxu0 0.0
    %581 = vmatprep.subr.mxu0 0.0
    %582 = vmatpush2.msra.mxu0 0.0
    %583 = vmatprep.mubr.f32.mxu0 0.0
    %584 = vmatmul.mubr.f32.gmra.mxu0 %v517
    %v585 = vpop.f32.mrf.mxu0
    %v586 = vadd.f32 0.0, %v585
    %v587 = vpop.f32.mrf.mxu0
    %588 = vdwg.mxu0
    %v590 = vsel %vm189, %v348, 0
    %592 = vmatprep.subr.mxu0 0.0
    %593 = vmatpush1.msra.mxu0 0.0
    %594 = vmatprep.subr.mxu0 0.0
    %595 = vmatpush1.msra.mxu0 0.0
    %596 = vmatprep.subr.mxu0 0.0
    %597 = vmatpush1.msra.mxu0 0.0
    %598 = vmatprep.subr.mxu0 0.0
    %599 = vmatpush1.msra.mxu0 0.0
    %600 = vmatprep.subr.mxu0 0.0
    %601 = vmatpush1.msra.mxu0 0.0
    %602 = vmatprep.subr.mxu0 0.0
    %603 = vmatpush1.msra.mxu0 0.0
    %604 = vmatprep.subr.mxu0 0.0
    %605 = vmatpush1.msra.mxu0 0.0
    %606 = vmatprep.subr.mxu0 0.0
    %607 = vmatpush1.msra.mxu0 0.0
    %608 = vmatprep.subr.mxu0 0.0
    %609 = vmatpush1.msra.mxu0 0.0
    %610 = vmatprep.subr.mxu0 0.0
    %611 = vmatpush1.msra.mxu0 0.0
    %612 = vmatprep.subr.mxu0 0.0
    %613 = vmatpush1.msra.mxu0 0.0
    %614 = vmatprep.subr.mxu0 0.0
    %615 = vmatpush1.msra.mxu0 0.0
    %616 = vmatprep.subr.mxu0 0.0
    %617 = vmatpush1.msra.mxu0 0.0
    %618 = vmatprep.subr.mxu0 0.0
    %619 = vmatpush1.msra.mxu0 0.0
    %620 = vmatprep.subr.mxu0 0.0
    %621 = vmatpush1.msra.mxu0 0.0
    %622 = vmatprep.subr.mxu0 0.0
    %623 = vmatpush1.msra.mxu0 %v178
    %624 = vmatprep.subr.mxu0 0.0
    %625 = vmatpush2.msra.mxu0 0.0
    %626 = vmatprep.subr.mxu0 0.0
    %627 = vmatpush2.msra.mxu0 0.0
    %628 = vmatprep.subr.mxu0 0.0
    %629 = vmatpush2.msra.mxu0 0.0
    %630 = vmatprep.subr.mxu0 0.0
    %631 = vmatpush2.msra.mxu0 0.0
    %632 = vmatprep.subr.mxu0 0.0
    %633 = vmatpush2.msra.mxu0 0.0
    %634 = vmatprep.subr.mxu0 0.0
    %635 = vmatpush2.msra.mxu0 0.0
    %636 = vmatprep.subr.mxu0 0.0
    %637 = vmatpush2.msra.mxu0 0.0
    %638 = vmatprep.subr.mxu0 0.0
    %639 = vmatpush2.msra.mxu0 0.0
    %640 = vmatprep.subr.mxu0 0.0
    %641 = vmatpush2.msra.mxu0 0.0
    %642 = vmatprep.subr.mxu0 0.0
    %643 = vmatpush2.msra.mxu0 0.0
    %644 = vmatprep.subr.mxu0 0.0
    %645 = vmatpush2.msra.mxu0 0.0
    %646 = vmatprep.subr.mxu0 0.0
    %647 = vmatpush2.msra.mxu0 0.0
    %648 = vmatprep.subr.mxu0 0.0
    %649 = vmatpush2.msra.mxu0 0.0
    %650 = vmatprep.subr.mxu0 0.0
    %651 = vmatpush2.msra.mxu0 0.0
    %652 = vmatprep.subr.mxu0 0.0
    %653 = vmatpush2.msra.mxu0 0.0
    %654 = vmatprep.subr.mxu0 0.0
    %655 = vmatpush2.msra.mxu0 0.0
    %656 = vmatprep.mubr.f32.mxu0 0.0
    %657 = vmatmul.mubr.f32.gmra.mxu0 %v590
    %v658 = vpop.f32.mrf.mxu0
    %v659 = vadd.f32 %v586, %v658
    %v660 = vpop.f32.mrf.mxu0
    %661 = vdwg.mxu0
    %662 = vrot.lane.b32.xlu0 %v170, 112
    %v663 = vpop.permute.xlu0 %662
    %664 = vrot.lane.b32.xlu0 %v170, 80
    %v665 = vpop.permute.xlu0 %664
    %v666 = vsel %vm189, %v663, 0
    %v668 = vsel %vm189, %v665, 0
    %670 = vmatprep.subr.mxu0 0.0
    %671 = vmatpush1.xpose.msra.mxu0 0.0
    %672 = vmatprep.subr.mxu0 0.0
    %673 = vmatpush1.xpose.msra.mxu0 0.0
    %674 = vmatprep.subr.mxu0 0.0
    %675 = vmatpush1.xpose.msra.mxu0 0.0
    %676 = vmatprep.subr.mxu0 0.0
    %677 = vmatpush1.xpose.msra.mxu0 0.0
    %678 = vmatprep.subr.mxu0 0.0
    %679 = vmatpush1.xpose.msra.mxu0 0.0
    %680 = vmatprep.subr.mxu0 0.0
    %681 = vmatpush1.xpose.msra.mxu0 0.0
    %682 = vmatprep.subr.mxu0 0.0
    %683 = vmatpush1.xpose.msra.mxu0 0.0
    %684 = vmatprep.subr.mxu0 0.0
    %685 = vmatpush1.xpose.msra.mxu0 0.0
    %686 = vmatprep.subr.mxu0 0.0
    %687 = vmatpush1.xpose.msra.mxu0 0.0
    %688 = vmatprep.subr.mxu0 0.0
    %689 = vmatpush1.xpose.msra.mxu0 0.0
    %690 = vmatprep.subr.mxu0 0.0
    %691 = vmatpush1.xpose.msra.mxu0 0.0
    %692 = vmatprep.subr.mxu0 0.0
    %693 = vmatpush1.xpose.msra.mxu0 0.0
    %694 = vmatprep.subr.mxu0 0.0
    %695 = vmatpush1.xpose.msra.mxu0 0.0
    %696 = vmatprep.subr.mxu0 0.0
    %697 = vmatpush1.xpose.msra.mxu0 0.0
    %698 = vmatprep.subr.mxu0 0.0
    %699 = vmatpush1.xpose.msra.mxu0 0.0
    %700 = vmatprep.subr.mxu0 0.0
    %701 = vmatpush1.xpose.msra.mxu0 %v668
    %702 = vmatprep.subr.mxu0 0.0
    %703 = vmatpush2.xpose.msra.mxu0 0.0
    %704 = vmatprep.subr.mxu0 0.0
    %705 = vmatpush2.xpose.msra.mxu0 0.0
    %706 = vmatprep.subr.mxu0 0.0
    %707 = vmatpush2.xpose.msra.mxu0 0.0
    %708 = vmatprep.subr.mxu0 0.0
    %709 = vmatpush2.xpose.msra.mxu0 0.0
    %710 = vmatprep.subr.mxu0 0.0
    %711 = vmatpush2.xpose.msra.mxu0 0.0
    %712 = vmatprep.subr.mxu0 0.0
    %713 = vmatpush2.xpose.msra.mxu0 0.0
    %714 = vmatprep.subr.mxu0 0.0
    %715 = vmatpush2.xpose.msra.mxu0 0.0
    %716 = vmatprep.subr.mxu0 0.0
    %717 = vmatpush2.xpose.msra.mxu0 0.0
    %718 = vmatprep.subr.mxu0 0.0
    %719 = vmatpush2.xpose.msra.mxu0 0.0
    %720 = vmatprep.subr.mxu0 0.0
    %721 = vmatpush2.xpose.msra.mxu0 0.0
    %722 = vmatprep.subr.mxu0 0.0
    %723 = vmatpush2.xpose.msra.mxu0 0.0
    %724 = vmatprep.subr.mxu0 0.0
    %725 = vmatpush2.xpose.msra.mxu0 0.0
    %726 = vmatprep.subr.mxu0 0.0
    %727 = vmatpush2.xpose.msra.mxu0 0.0
    %728 = vmatprep.subr.mxu0 0.0
    %729 = vmatpush2.xpose.msra.mxu0 0.0
    %730 = vmatprep.subr.mxu0 0.0
    %731 = vmatpush2.xpose.msra.mxu0 0.0
    %732 = vmatprep.subr.mxu0 0.0
    %733 = vmatpush2.xpose.msra.mxu0 0.0
    %734 = vmatprep.mubr.f32.mxu0 0.0
    %735 = vmatmul.mubr.f32.gmra.mxu0 %v666
    %v736 = vpop.f32.mrf.mxu0
    %v737 = vadd.f32 %v185, %v736
    %v738 = vpop.f32.mrf.mxu0
    %739 = vdwg.mxu0
    %v740 = vsel %vm189, %v737, -inf
    %741 = vmax.xlane.f32.xlu0 %v740
    %v742 = vpop.xlane.xlu0 %741
    %v743 = vsub.f32 %v737, %v742
    %v744 = vmul.f32 %v743, 1.442695
    %v745 = vpow.pop %v744
    %v746 = vsel %vm189, %v745, 0.0
    %747 = vadd.xlane.f32.xlu0 %v746
    %v748 = vpop.xlane.xlu0 %747
    %v749 = vrcp.pop %v748
    %v750 = vmul.f32 %v745, %v749
    %751 = vrot.lane.b32.xlu0 %v170, 48
    %v752 = vpop.permute.xlu0 %751
    %v755 = vsel %vm189, %v750, 0
    %757 = vmatprep.subr.mxu0 0.0
    %758 = vmatpush1.msra.mxu0 0.0
    %759 = vmatprep.subr.mxu0 0.0
    %760 = vmatpush1.msra.mxu0 0.0
    %761 = vmatprep.subr.mxu0 0.0
    %762 = vmatpush1.msra.mxu0 0.0
    %763 = vmatprep.subr.mxu0 0.0
    %764 = vmatpush1.msra.mxu0 0.0
    %765 = vmatprep.subr.mxu0 0.0
    %766 = vmatpush1.msra.mxu0 0.0
    %767 = vmatprep.subr.mxu0 0.0
    %768 = vmatpush1.msra.mxu0 0.0
    %769 = vmatprep.subr.mxu0 0.0
    %770 = vmatpush1.msra.mxu0 0.0
    %771 = vmatprep.subr.mxu0 0.0
    %772 = vmatpush1.msra.mxu0 0.0
    %773 = vmatprep.subr.mxu0 0.0
    %774 = vmatpush1.msra.mxu0 0.0
    %775 = vmatprep.subr.mxu0 0.0
    %776 = vmatpush1.msra.mxu0 0.0
    %777 = vmatprep.subr.mxu0 0.0
    %778 = vmatpush1.msra.mxu0 0.0
    %779 = vmatprep.subr.mxu0 0.0
    %780 = vmatpush1.msra.mxu0 0.0
    %781 = vmatprep.subr.mxu0 0.0
    %782 = vmatpush1.msra.mxu0 0.0
    %783 = vmatprep.subr.mxu0 0.0
    %784 = vmatpush1.msra.mxu0 0.0
    %785 = vmatprep.subr.mxu0 0.0
    %786 = vmatpush1.msra.mxu0 0.0
    %787 = vmatprep.subr.mxu0 0.0
    %788 = vmatpush1.msra.mxu0 %v752
    %789 = vmatprep.subr.mxu0 0.0
    %790 = vmatpush2.msra.mxu0 0.0
    %791 = vmatprep.subr.mxu0 0.0
    %792 = vmatpush2.msra.mxu0 0.0
    %793 = vmatprep.subr.mxu0 0.0
    %794 = vmatpush2.msra.mxu0 0.0
    %795 = vmatprep.subr.mxu0 0.0
    %796 = vmatpush2.msra.mxu0 0.0
    %797 = vmatprep.subr.mxu0 0.0
    %798 = vmatpush2.msra.mxu0 0.0
    %799 = vmatprep.subr.mxu0 0.0
    %800 = vmatpush2.msra.mxu0 0.0
    %801 = vmatprep.subr.mxu0 0.0
    %802 = vmatpush2.msra.mxu0 0.0
    %803 = vmatprep.subr.mxu0 0.0
    %804 = vmatpush2.msra.mxu0 0.0
    %805 = vmatprep.subr.mxu0 0.0
    %806 = vmatpush2.msra.mxu0 0.0
    %807 = vmatprep.subr.mxu0 0.0
    %808 = vmatpush2.msra.mxu0 0.0
    %809 = vmatprep.subr.mxu0 0.0
    %810 = vmatpush2.msra.mxu0 0.0
    %811 = vmatprep.subr.mxu0 0.0
    %812 = vmatpush2.msra.mxu0 0.0
    %813 = vmatprep.subr.mxu0 0.0
    %814 = vmatpush2.msra.mxu0 0.0
    %815 = vmatprep.subr.mxu0 0.0
    %816 = vmatpush2.msra.mxu0 0.0
    %817 = vmatprep.subr.mxu0 0.0
    %818 = vmatpush2.msra.mxu0 0.0
    %819 = vmatprep.subr.mxu0 0.0
    %820 = vmatpush2.msra.mxu0 0.0
    %821 = vmatprep.mubr.f32.mxu0 0.0
    %822 = vmatmul.mubr.f32.gmra.mxu0 %v755
    %v823 = vpop.f32.mrf.mxu0
    %v824 = vadd.f32 0.0, %v823
    %v825 = vpop.f32.mrf.mxu0
    %826 = vdwg.mxu0
    %v828 = vsel %vm189, %v824, 0
    %830 = vmatprep.subr.mxu0 0.0
    %831 = vmatpush1.msra.mxu0 0.0
    %832 = vmatprep.subr.mxu0 0.0
    %833 = vmatpush1.msra.mxu0 0.0
    %834 = vmatprep.subr.mxu0 0.0
    %835 = vmatpush1.msra.mxu0 0.0
    %836 = vmatprep.subr.mxu0 0.0
    %837 = vmatpush1.msra.mxu0 0.0
    %838 = vmatprep.subr.mxu0 0.0
    %839 = vmatpush1.msra.mxu0 0.0
    %840 = vmatprep.subr.mxu0 0.0
    %841 = vmatpush1.msra.mxu0 0.0
    %842 = vmatprep.subr.mxu0 0.0
    %843 = vmatpush1.msra.mxu0 0.0
    %844 = vmatprep.subr.mxu0 0.0
    %845 = vmatpush1.msra.mxu0 0.0
    %846 = vmatprep.subr.mxu0 0.0
    %847 = vmatpush1.msra.mxu0 0.0
    %848 = vmatprep.subr.mxu0 0.0
    %849 = vmatpush1.msra.mxu0 0.0
    %850 = vmatprep.subr.mxu0 0.0
    %851 = vmatpush1.msra.mxu0 0.0
    %852 = vmatprep.subr.mxu0 0.0
    %853 = vmatpush1.msra.mxu0 0.0
    %854 = vmatprep.subr.mxu0 0.0
    %855 = vmatpush1.msra.mxu0 0.0
    %856 = vmatprep.subr.mxu0 0.0
    %857 = vmatpush1.msra.mxu0 0.0
    %858 = vmatprep.subr.mxu0 0.0
    %859 = vmatpush1.msra.mxu0 0.0
    %860 = vmatprep.subr.mxu0 0.0
    %861 = vmatpush1.msra.mxu0 %v180
    %862 = vmatprep.subr.mxu0 0.0
    %863 = vmatpush2.msra.mxu0 0.0
    %864 = vmatprep.subr.mxu0 0.0
    %865 = vmatpush2.msra.mxu0 0.0
    %866 = vmatprep.subr.mxu0 0.0
    %867 = vmatpush2.msra.mxu0 0.0
    %868 = vmatprep.subr.mxu0 0.0
    %869 = vmatpush2.msra.mxu0 0.0
    %870 = vmatprep.subr.mxu0 0.0
    %871 = vmatpush2.msra.mxu0 0.0
    %872 = vmatprep.subr.mxu0 0.0
    %873 = vmatpush2.msra.mxu0 0.0
    %874 = vmatprep.subr.mxu0 0.0
    %875 = vmatpush2.msra.mxu0 0.0
    %876 = vmatprep.subr.mxu0 0.0
    %877 = vmatpush2.msra.mxu0 0.0
    %878 = vmatprep.subr.mxu0 0.0
    %879 = vmatpush2.msra.mxu0 0.0
    %880 = vmatprep.subr.mxu0 0.0
    %881 = vmatpush2.msra.mxu0 0.0
    %882 = vmatprep.subr.mxu0 0.0
    %883 = vmatpush2.msra.mxu0 0.0
    %884 = vmatprep.subr.mxu0 0.0
    %885 = vmatpush2.msra.mxu0 0.0
    %886 = vmatprep.subr.mxu0 0.0
    %887 = vmatpush2.msra.mxu0 0.0
    %888 = vmatprep.subr.mxu0 0.0
    %889 = vmatpush2.msra.mxu0 0.0
    %890 = vmatprep.subr.mxu0 0.0
    %891 = vmatpush2.msra.mxu0 0.0
    %892 = vmatprep.subr.mxu0 0.0
    %893 = vmatpush2.msra.mxu0 0.0
    %894 = vmatprep.mubr.f32.mxu0 0.0
    %895 = vmatmul.mubr.f32.gmra.mxu0 %v828
    %v896 = vpop.f32.mrf.mxu0
    %v897 = vadd.f32 0.0, %v896
    %v898 = vpop.f32.mrf.mxu0
    %899 = vdwg.mxu0
    %v900 = vadd.f32 %v659, %v897
    %901 = vrot.lane.b32.xlu0 %v170, 104
    %v902 = vpop.permute.xlu0 %901
    %903 = vrot.lane.b32.xlu0 %v170, 72
    %v904 = vpop.permute.xlu0 %903
    %v905 = vsel %vm189, %v902, 0
    %v907 = vsel %vm189, %v904, 0
    %909 = vmatprep.subr.mxu0 0.0
    %910 = vmatpush1.xpose.msra.mxu0 0.0
    %911 = vmatprep.subr.mxu0 0.0
    %912 = vmatpush1.xpose.msra.mxu0 0.0
    %913 = vmatprep.subr.mxu0 0.0
    %914 = vmatpush1.xpose.msra.mxu0 0.0
    %915 = vmatprep.subr.mxu0 0.0
    %916 = vmatpush1.xpose.msra.mxu0 0.0
    %917 = vmatprep.subr.mxu0 0.0
    %918 = vmatpush1.xpose.msra.mxu0 0.0
    %919 = vmatprep.subr.mxu0 0.0
    %920 = vmatpush1.xpose.msra.mxu0 0.0
    %921 = vmatprep.subr.mxu0 0.0
    %922 = vmatpush1.xpose.msra.mxu0 0.0
    %923 = vmatprep.subr.mxu0 0.0
    %924 = vmatpush1.xpose.msra.mxu0 0.0
    %925 = vmatprep.subr.mxu0 0.0
    %926 = vmatpush1.xpose.msra.mxu0 0.0
    %927 = vmatprep.subr.mxu0 0.0
    %928 = vmatpush1.xpose.msra.mxu0 0.0
    %929 = vmatprep.subr.mxu0 0.0
    %930 = vmatpush1.xpose.msra.mxu0 0.0
    %931 = vmatprep.subr.mxu0 0.0
    %932 = vmatpush1.xpose.msra.mxu0 0.0
    %933 = vmatprep.subr.mxu0 0.0
    %934 = vmatpush1.xpose.msra.mxu0 0.0
    %935 = vmatprep.subr.mxu0 0.0
    %936 = vmatpush1.xpose.msra.mxu0 0.0
    %937 = vmatprep.subr.mxu0 0.0
    %938 = vmatpush1.xpose.msra.mxu0 0.0
    %939 = vmatprep.subr.mxu0 0.0
    %940 = vmatpush1.xpose.msra.mxu0 %v907
    %941 = vmatprep.subr.mxu0 0.0
    %942 = vmatpush2.xpose.msra.mxu0 0.0
    %943 = vmatprep.subr.mxu0 0.0
    %944 = vmatpush2.xpose.msra.mxu0 0.0
    %945 = vmatprep.subr.mxu0 0.0
    %946 = vmatpush2.xpose.msra.mxu0 0.0
    %947 = vmatprep.subr.mxu0 0.0
    %948 = vmatpush2.xpose.msra.mxu0 0.0
    %949 = vmatprep.subr.mxu0 0.0
    %950 = vmatpush2.xpose.msra.mxu0 0.0
    %951 = vmatprep.subr.mxu0 0.0
    %952 = vmatpush2.xpose.msra.mxu0 0.0
    %953 = vmatprep.subr.mxu0 0.0
    %954 = vmatpush2.xpose.msra.mxu0 0.0
    %955 = vmatprep.subr.mxu0 0.0
    %956 = vmatpush2.xpose.msra.mxu0 0.0
    %957 = vmatprep.subr.mxu0 0.0
    %958 = vmatpush2.xpose.msra.mxu0 0.0
    %959 = vmatprep.subr.mxu0 0.0
    %960 = vmatpush2.xpose.msra.mxu0 0.0
    %961 = vmatprep.subr.mxu0 0.0
    %962 = vmatpush2.xpose.msra.mxu0 0.0
    %963 = vmatprep.subr.mxu0 0.0
    %964 = vmatpush2.xpose.msra.mxu0 0.0
    %965 = vmatprep.subr.mxu0 0.0
    %966 = vmatpush2.xpose.msra.mxu0 0.0
    %967 = vmatprep.subr.mxu0 0.0
    %968 = vmatpush2.xpose.msra.mxu0 0.0
    %969 = vmatprep.subr.mxu0 0.0
    %970 = vmatpush2.xpose.msra.mxu0 0.0
    %971 = vmatprep.subr.mxu0 0.0
    %972 = vmatpush2.xpose.msra.mxu0 0.0
    %973 = vmatprep.mubr.f32.mxu0 0.0
    %974 = vmatmul.mubr.f32.gmra.mxu0 %v905
    %v975 = vpop.f32.mrf.mxu0
    %v976 = vadd.f32 %v185, %v975
    %v977 = vpop.f32.mrf.mxu0
    %978 = vdwg.mxu0
    %v979 = vsel %vm189, %v976, -inf
    %980 = vmax.xlane.f32.xlu0 %v979
    %v981 = vpop.xlane.xlu0 %980
    %v982 = vsub.f32 %v976, %v981
    %v983 = vmul.f32 %v982, 1.442695
    %v984 = vpow.pop %v983
    %v985 = vsel %vm189, %v984, 0.0
    %986 = vadd.xlane.f32.xlu0 %v985
    %v987 = vpop.xlane.xlu0 %986
    %v988 = vrcp.pop %v987
    %v989 = vmul.f32 %v984, %v988
    %990 = vrot.lane.b32.xlu0 %v170, 40
    %v991 = vpop.permute.xlu0 %990
    %v994 = vsel %vm189, %v989, 0
    %996 = vmatprep.subr.mxu0 0.0
    %997 = vmatpush1.msra.mxu0 0.0
    %998 = vmatprep.subr.mxu0 0.0
    %999 = vmatpush1.msra.mxu0 0.0
    %1000 = vmatprep.subr.mxu0 0.0
    %1001 = vmatpush1.msra.mxu0 0.0
    %1002 = vmatprep.subr.mxu0 0.0
    %1003 = vmatpush1.msra.mxu0 0.0
    %1004 = vmatprep.subr.mxu0 0.0
    %1005 = vmatpush1.msra.mxu0 0.0
    %1006 = vmatprep.subr.mxu0 0.0
    %1007 = vmatpush1.msra.mxu0 0.0
    %1008 = vmatprep.subr.mxu0 0.0
    %1009 = vmatpush1.msra.mxu0 0.0
    %1010 = vmatprep.subr.mxu0 0.0
    %1011 = vmatpush1.msra.mxu0 0.0
    %1012 = vmatprep.subr.mxu0 0.0
    %1013 = vmatpush1.msra.mxu0 0.0
    %1014 = vmatprep.subr.mxu0 0.0
    %1015 = vmatpush1.msra.mxu0 0.0
    %1016 = vmatprep.subr.mxu0 0.0
    %1017 = vmatpush1.msra.mxu0 0.0
    %1018 = vmatprep.subr.mxu0 0.0
    %1019 = vmatpush1.msra.mxu0 0.0
    %1020 = vmatprep.subr.mxu0 0.0
    %1021 = vmatpush1.msra.mxu0 0.0
    %1022 = vmatprep.subr.mxu0 0.0
    %1023 = vmatpush1.msra.mxu0 0.0
    %1024 = vmatprep.subr.mxu0 0.0
    %1025 = vmatpush1.msra.mxu0 0.0
    %1026 = vmatprep.subr.mxu0 0.0
    %1027 = vmatpush1.msra.mxu0 %v991
    %1028 = vmatprep.subr.mxu0 0.0
    %1029 = vmatpush2.msra.mxu0 0.0
    %1030 = vmatprep.subr.mxu0 0.0
    %1031 = vmatpush2.msra.mxu0 0.0
    %1032 = vmatprep.subr.mxu0 0.0
    %1033 = vmatpush2.msra.mxu0 0.0
    %1034 = vmatprep.subr.mxu0 0.0
    %1035 = vmatpush2.msra.mxu0 0.0
    %1036 = vmatprep.subr.mxu0 0.0
    %1037 = vmatpush2.msra.mxu0 0.0
    %1038 = vmatprep.subr.mxu0 0.0
    %1039 = vmatpush2.msra.mxu0 0.0
    %1040 = vmatprep.subr.mxu0 0.0
    %1041 = vmatpush2.msra.mxu0 0.0
    %1042 = vmatprep.subr.mxu0 0.0
    %1043 = vmatpush2.msra.mxu0 0.0
    %1044 = vmatprep.subr.mxu0 0.0
    %1045 = vmatpush2.msra.mxu0 0.0
    %1046 = vmatprep.subr.mxu0 0.0
    %1047 = vmatpush2.msra.mxu0 0.0
    %1048 = vmatprep.subr.mxu0 0.0
    %1049 = vmatpush2.msra.mxu0 0.0
    %1050 = vmatprep.subr.mxu0 0.0
    %1051 = vmatpush2.msra.mxu0 0.0
    %1052 = vmatprep.subr.mxu0 0.0
    %1053 = vmatpush2.msra.mxu0 0.0
    %1054 = vmatprep.subr.mxu0 0.0
    %1055 = vmatpush2.msra.mxu0 0.0
    %1056 = vmatprep.subr.mxu0 0.0
    %1057 = vmatpush2.msra.mxu0 0.0
    %1058 = vmatprep.subr.mxu0 0.0
    %1059 = vmatpush2.msra.mxu0 0.0
    %1060 = vmatprep.mubr.f32.mxu0 0.0
    %1061 = vmatmul.mubr.f32.gmra.mxu0 %v994
    %v1062 = vpop.f32.mrf.mxu0
    %v1063 = vadd.f32 0.0, %v1062
    %v1064 = vpop.f32.mrf.mxu0
    %1065 = vdwg.mxu0
    %v1067 = vsel %vm189, %v1063, 0
    %1069 = vmatprep.subr.mxu0 0.0
    %1070 = vmatpush1.msra.mxu0 0.0
    %1071 = vmatprep.subr.mxu0 0.0
    %1072 = vmatpush1.msra.mxu0 0.0
    %1073 = vmatprep.subr.mxu0 0.0
    %1074 = vmatpush1.msra.mxu0 0.0
    %1075 = vmatprep.subr.mxu0 0.0
    %1076 = vmatpush1.msra.mxu0 0.0
    %1077 = vmatprep.subr.mxu0 0.0
    %1078 = vmatpush1.msra.mxu0 0.0
    %1079 = vmatprep.subr.mxu0 0.0
    %1080 = vmatpush1.msra.mxu0 0.0
    %1081 = vmatprep.subr.mxu0 0.0
    %1082 = vmatpush1.msra.mxu0 0.0
    %1083 = vmatprep.subr.mxu0 0.0
    %1084 = vmatpush1.msra.mxu0 0.0
    %1085 = vmatprep.subr.mxu0 0.0
    %1086 = vmatpush1.msra.mxu0 0.0
    %1087 = vmatprep.subr.mxu0 0.0
    %1088 = vmatpush1.msra.mxu0 0.0
    %1089 = vmatprep.subr.mxu0 0.0
    %1090 = vmatpush1.msra.mxu0 0.0
    %1091 = vmatprep.subr.mxu0 0.0
    %1092 = vmatpush1.msra.mxu0 0.0
    %1093 = vmatprep.subr.mxu0 0.0
    %1094 = vmatpush1.msra.mxu0 0.0
    %1095 = vmatprep.subr.mxu0 0.0
    %1096 = vmatpush1.msra.mxu0 0.0
    %1097 = vmatprep.subr.mxu0 0.0
    %1098 = vmatpush1.msra.mxu0 0.0
    %1099 = vmatprep.subr.mxu0 0.0
    %1100 = vmatpush1.msra.mxu0 %v181
    %1101 = vmatprep.subr.mxu0 0.0
    %1102 = vmatpush2.msra.mxu0 0.0
    %1103 = vmatprep.subr.mxu0 0.0
    %1104 = vmatpush2.msra.mxu0 0.0
    %1105 = vmatprep.subr.mxu0 0.0
    %1106 = vmatpush2.msra.mxu0 0.0
    %1107 = vmatprep.subr.mxu0 0.0
    %1108 = vmatpush2.msra.mxu0 0.0
    %1109 = vmatprep.subr.mxu0 0.0
    %1110 = vmatpush2.msra.mxu0 0.0
    %1111 = vmatprep.subr.mxu0 0.0
    %1112 = vmatpush2.msra.mxu0 0.0
    %1113 = vmatprep.subr.mxu0 0.0
    %1114 = vmatpush2.msra.mxu0 0.0
    %1115 = vmatprep.subr.mxu0 0.0
    %1116 = vmatpush2.msra.mxu0 0.0
    %1117 = vmatprep.subr.mxu0 0.0
    %1118 = vmatpush2.msra.mxu0 0.0
    %1119 = vmatprep.subr.mxu0 0.0
    %1120 = vmatpush2.msra.mxu0 0.0
    %1121 = vmatprep.subr.mxu0 0.0
    %1122 = vmatpush2.msra.mxu0 0.0
    %1123 = vmatprep.subr.mxu0 0.0
    %1124 = vmatpush2.msra.mxu0 0.0
    %1125 = vmatprep.subr.mxu0 0.0
    %1126 = vmatpush2.msra.mxu0 0.0
    %1127 = vmatprep.subr.mxu0 0.0
    %1128 = vmatpush2.msra.mxu0 0.0
    %1129 = vmatprep.subr.mxu0 0.0
    %1130 = vmatpush2.msra.mxu0 0.0
    %1131 = vmatprep.subr.mxu0 0.0
    %1132 = vmatpush2.msra.mxu0 0.0
    %1133 = vmatprep.mubr.f32.mxu0 0.0
    %1134 = vmatmul.mubr.f32.gmra.mxu0 %v1067
    %v1135 = vpop.f32.mrf.mxu0
    %v1136 = vadd.f32 0.0, %v1135
    %v1137 = vpop.f32.mrf.mxu0
    %1138 = vdwg.mxu0
    %v1139 = vadd.f32 %v900, %v1136
    %1141 = vrot.lane.b32.xlu0 %v175, 96
    %v1142 = vpop.permute.xlu0 %1141
    %1144 = vrot.lane.b32.xlu0 %v185, 120
    %v1145 = vpop.permute.xlu0 %1144
    %v1147 = vsel %vm189, %v175, 0
    %v1149 = vsel %vm189, %v1142, 0
    %1151 = vmatprep.subr.mxu0 0.0
    %1152 = vmatpush1.xpose.msra.mxu0 0.0
    %1153 = vmatprep.subr.mxu0 0.0
    %1154 = vmatpush1.xpose.msra.mxu0 0.0
    %1155 = vmatprep.subr.mxu0 0.0
    %1156 = vmatpush1.xpose.msra.mxu0 0.0
    %1157 = vmatprep.subr.mxu0 0.0
    %1158 = vmatpush1.xpose.msra.mxu0 0.0
    %1159 = vmatprep.subr.mxu0 0.0
    %1160 = vmatpush1.xpose.msra.mxu0 0.0
    %1161 = vmatprep.subr.mxu0 0.0
    %1162 = vmatpush1.xpose.msra.mxu0 0.0
    %1163 = vmatprep.subr.mxu0 0.0
    %1164 = vmatpush1.xpose.msra.mxu0 0.0
    %1165 = vmatprep.subr.mxu0 0.0
    %1166 = vmatpush1.xpose.msra.mxu0 0.0
    %1167 = vmatprep.subr.mxu0 0.0
    %1168 = vmatpush1.xpose.msra.mxu0 0.0
    %1169 = vmatprep.subr.mxu0 0.0
    %1170 = vmatpush1.xpose.msra.mxu0 0.0
    %1171 = vmatprep.subr.mxu0 0.0
    %1172 = vmatpush1.xpose.msra.mxu0 0.0
    %1173 = vmatprep.subr.mxu0 0.0
    %1174 = vmatpush1.xpose.msra.mxu0 0.0
    %1175 = vmatprep.subr.mxu0 0.0
    %1176 = vmatpush1.xpose.msra.mxu0 0.0
    %1177 = vmatprep.subr.mxu0 0.0
    %1178 = vmatpush1.xpose.msra.mxu0 0.0
    %1179 = vmatprep.subr.mxu0 0.0
    %1180 = vmatpush1.xpose.msra.mxu0 0.0
    %1181 = vmatprep.subr.mxu0 0.0
    %1182 = vmatpush1.xpose.msra.mxu0 %v1149
    %1183 = vmatprep.subr.mxu0 0.0
    %1184 = vmatpush2.xpose.msra.mxu0 0.0
    %1185 = vmatprep.subr.mxu0 0.0
    %1186 = vmatpush2.xpose.msra.mxu0 0.0
    %1187 = vmatprep.subr.mxu0 0.0
    %1188 = vmatpush2.xpose.msra.mxu0 0.0
    %1189 = vmatprep.subr.mxu0 0.0
    %1190 = vmatpush2.xpose.msra.mxu0 0.0
    %1191 = vmatprep.subr.mxu0 0.0
    %1192 = vmatpush2.xpose.msra.mxu0 0.0
    %1193 = vmatprep.subr.mxu0 0.0
    %1194 = vmatpush2.xpose.msra.mxu0 0.0
    %1195 = vmatprep.subr.mxu0 0.0
    %1196 = vmatpush2.xpose.msra.mxu0 0.0
    %1197 = vmatprep.subr.mxu0 0.0
    %1198 = vmatpush2.xpose.msra.mxu0 0.0
    %1199 = vmatprep.subr.mxu0 0.0
    %1200 = vmatpush2.xpose.msra.mxu0 0.0
    %1201 = vmatprep.subr.mxu0 0.0
    %1202 = vmatpush2.xpose.msra.mxu0 0.0
    %1203 = vmatprep.subr.mxu0 0.0
    %1204 = vmatpush2.xpose.msra.mxu0 0.0
    %1205 = vmatprep.subr.mxu0 0.0
    %1206 = vmatpush2.xpose.msra.mxu0 0.0
    %1207 = vmatprep.subr.mxu0 0.0
    %1208 = vmatpush2.xpose.msra.mxu0 0.0
    %1209 = vmatprep.subr.mxu0 0.0
    %1210 = vmatpush2.xpose.msra.mxu0 0.0
    %1211 = vmatprep.subr.mxu0 0.0
    %1212 = vmatpush2.xpose.msra.mxu0 0.0
    %1213 = vmatprep.subr.mxu0 0.0
    %1214 = vmatpush2.xpose.msra.mxu0 0.0
    %1215 = vmatprep.mubr.f32.mxu0 0.0
    %1216 = vmatmul.mubr.f32.gmra.mxu0 %v1147
    %v1217 = vpop.f32.mrf.mxu0
    %v1218 = vadd.f32 %v1145, %v1217
    %v1219 = vpop.f32.mrf.mxu0
    %1220 = vdwg.mxu0
    %v1221 = vsel %vm189, %v1218, -inf
    %1222 = vmax.xlane.f32.xlu0 %v1221
    %v1223 = vpop.xlane.xlu0 %1222
    %v1224 = vsub.f32 %v1218, %v1223
    %v1225 = vmul.f32 %v1224, 1.442695
    %v1226 = vpow.pop %v1225
    %v1227 = vsel %vm189, %v1226, 0.0
    %1228 = vadd.xlane.f32.xlu0 %v1227
    %v1229 = vpop.xlane.xlu0 %1228
    %v1230 = vrcp.pop %v1229
    %v1231 = vmul.f32 %v1226, %v1230
    %1232 = vrot.lane.b32.xlu0 %v175, 64
    %v1233 = vpop.permute.xlu0 %1232
    %v1236 = vsel %vm189, %v1231, 0
    %1238 = vmatprep.subr.mxu0 0.0
    %1239 = vmatpush1.msra.mxu0 0.0
    %1240 = vmatprep.subr.mxu0 0.0
    %1241 = vmatpush1.msra.mxu0 0.0
    %1242 = vmatprep.subr.mxu0 0.0
    %1243 = vmatpush1.msra.mxu0 0.0
    %1244 = vmatprep.subr.mxu0 0.0
    %1245 = vmatpush1.msra.mxu0 0.0
    %1246 = vmatprep.subr.mxu0 0.0
    %1247 = vmatpush1.msra.mxu0 0.0
    %1248 = vmatprep.subr.mxu0 0.0
    %1249 = vmatpush1.msra.mxu0 0.0
    %1250 = vmatprep.subr.mxu0 0.0
    %1251 = vmatpush1.msra.mxu0 0.0
    %1252 = vmatprep.subr.mxu0 0.0
    %1253 = vmatpush1.msra.mxu0 0.0
    %1254 = vmatprep.subr.mxu0 0.0
    %1255 = vmatpush1.msra.mxu0 0.0
    %1256 = vmatprep.subr.mxu0 0.0
    %1257 = vmatpush1.msra.mxu0 0.0
    %1258 = vmatprep.subr.mxu0 0.0
    %1259 = vmatpush1.msra.mxu0 0.0
    %1260 = vmatprep.subr.mxu0 0.0
    %1261 = vmatpush1.msra.mxu0 0.0
    %1262 = vmatprep.subr.mxu0 0.0
    %1263 = vmatpush1.msra.mxu0 0.0
    %1264 = vmatprep.subr.mxu0 0.0
    %1265 = vmatpush1.msra.mxu0 0.0
    %1266 = vmatprep.subr.mxu0 0.0
    %1267 = vmatpush1.msra.mxu0 0.0
    %1268 = vmatprep.subr.mxu0 0.0
    %1269 = vmatpush1.msra.mxu0 %v1233
    %1270 = vmatprep.subr.mxu0 0.0
    %1271 = vmatpush2.msra.mxu0 0.0
    %1272 = vmatprep.subr.mxu0 0.0
    %1273 = vmatpush2.msra.mxu0 0.0
    %1274 = vmatprep.subr.mxu0 0.0
    %1275 = vmatpush2.msra.mxu0 0.0
    %1276 = vmatprep.subr.mxu0 0.0
    %1277 = vmatpush2.msra.mxu0 0.0
    %1278 = vmatprep.subr.mxu0 0.0
    %1279 = vmatpush2.msra.mxu0 0.0
    %1280 = vmatprep.subr.mxu0 0.0
    %1281 = vmatpush2.msra.mxu0 0.0
    %1282 = vmatprep.subr.mxu0 0.0
    %1283 = vmatpush2.msra.mxu0 0.0
    %1284 = vmatprep.subr.mxu0 0.0
    %1285 = vmatpush2.msra.mxu0 0.0
    %1286 = vmatprep.subr.mxu0 0.0
    %1287 = vmatpush2.msra.mxu0 0.0
    %1288 = vmatprep.subr.mxu0 0.0
    %1289 = vmatpush2.msra.mxu0 0.0
    %1290 = vmatprep.subr.mxu0 0.0
    %1291 = vmatpush2.msra.mxu0 0.0
    %1292 = vmatprep.subr.mxu0 0.0
    %1293 = vmatpush2.msra.mxu0 0.0
    %1294 = vmatprep.subr.mxu0 0.0
    %1295 = vmatpush2.msra.mxu0 0.0
    %1296 = vmatprep.subr.mxu0 0.0
    %1297 = vmatpush2.msra.mxu0 0.0
    %1298 = vmatprep.subr.mxu0 0.0
    %1299 = vmatpush2.msra.mxu0 0.0
    %1300 = vmatprep.subr.mxu0 0.0
    %1301 = vmatpush2.msra.mxu0 0.0
    %1302 = vmatprep.mubr.f32.mxu0 0.0
    %1303 = vmatmul.mubr.f32.gmra.mxu0 %v1236
    %v1304 = vpop.f32.mrf.mxu0
    %v1305 = vadd.f32 0.0, %v1304
    %v1306 = vpop.f32.mrf.mxu0
    %1307 = vdwg.mxu0
    %1308 = vrot.lane.b32.xlu0 %v175, 120
    %v1309 = vpop.permute.xlu0 %1308
    %1310 = vrot.lane.b32.xlu0 %v175, 88
    %v1311 = vpop.permute.xlu0 %1310
    %v1312 = vsel %vm189, %v1309, 0
    %v1314 = vsel %vm189, %v1311, 0
    %1316 = vmatprep.subr.mxu0 0.0
    %1317 = vmatpush1.xpose.msra.mxu0 0.0
    %1318 = vmatprep.subr.mxu0 0.0
    %1319 = vmatpush1.xpose.msra.mxu0 0.0
    %1320 = vmatprep.subr.mxu0 0.0
    %1321 = vmatpush1.xpose.msra.mxu0 0.0
    %1322 = vmatprep.subr.mxu0 0.0
    %1323 = vmatpush1.xpose.msra.mxu0 0.0
    %1324 = vmatprep.subr.mxu0 0.0
    %1325 = vmatpush1.xpose.msra.mxu0 0.0
    %1326 = vmatprep.subr.mxu0 0.0
    %1327 = vmatpush1.xpose.msra.mxu0 0.0
    %1328 = vmatprep.subr.mxu0 0.0
    %1329 = vmatpush1.xpose.msra.mxu0 0.0
    %1330 = vmatprep.subr.mxu0 0.0
    %1331 = vmatpush1.xpose.msra.mxu0 0.0
    %1332 = vmatprep.subr.mxu0 0.0
    %1333 = vmatpush1.xpose.msra.mxu0 0.0
    %1334 = vmatprep.subr.mxu0 0.0
    %1335 = vmatpush1.xpose.msra.mxu0 0.0
    %1336 = vmatprep.subr.mxu0 0.0
    %1337 = vmatpush1.xpose.msra.mxu0 0.0
    %1338 = vmatprep.subr.mxu0 0.0
    %1339 = vmatpush1.xpose.msra.mxu0 0.0
    %1340 = vmatprep.subr.mxu0 0.0
    %1341 = vmatpush1.xpose.msra.mxu0 0.0
    %1342 = vmatprep.subr.mxu0 0.0
    %1343 = vmatpush1.xpose.msra.mxu0 0.0
    %1344 = vmatprep.subr.mxu0 0.0
    %1345 = vmatpush1.xpose.msra.mxu0 0.0
    %1346 = vmatprep.subr.mxu0 0.0
    %1347 = vmatpush1.xpose.msra.mxu0 %v1314
    %1348 = vmatprep.subr.mxu0 0.0
    %1349 = vmatpush2.xpose.msra.mxu0 0.0
    %1350 = vmatprep.subr.mxu0 0.0
    %1351 = vmatpush2.xpose.msra.mxu0 0.0
    %1352 = vmatprep.subr.mxu0 0.0
    %1353 = vmatpush2.xpose.msra.mxu0 0.0
    %1354 = vmatprep.subr.mxu0 0.0
    %1355 = vmatpush2.xpose.msra.mxu0 0.0
    %1356 = vmatprep.subr.mxu0 0.0
    %1357 = vmatpush2.xpose.msra.mxu0 0.0
    %1358 = vmatprep.subr.mxu0 0.0
    %1359 = vmatpush2.xpose.msra.mxu0 0.0
    %1360 = vmatprep.subr.mxu0 0.0
    %1361 = vmatpush2.xpose.msra.mxu0 0.0
    %1362 = vmatprep.subr.mxu0 0.0
    %1363 = vmatpush2.xpose.msra.mxu0 0.0
    %1364 = vmatprep.subr.mxu0 0.0
    %1365 = vmatpush2.xpose.msra.mxu0 0.0
    %1366 = vmatprep.subr.mxu0 0.0
    %1367 = vmatpush2.xpose.msra.mxu0 0.0
    %1368 = vmatprep.subr.mxu0 0.0
    %1369 = vmatpush2.xpose.msra.mxu0 0.0
    %1370 = vmatprep.subr.mxu0 0.0
    %1371 = vmatpush2.xpose.msra.mxu0 0.0
    %1372 = vmatprep.subr.mxu0 0.0
    %1373 = vmatpush2.xpose.msra.mxu0 0.0
    %1374 = vmatprep.subr.mxu0 0.0
    %1375 = vmatpush2.xpose.msra.mxu0 0.0
    %1376 = vmatprep.subr.mxu0 0.0
    %1377 = vmatpush2.xpose.msra.mxu0 0.0
    %1378 = vmatprep.subr.mxu0 0.0
    %1379 = vmatpush2.xpose.msra.mxu0 0.0
    %1380 = vmatprep.mubr.f32.mxu0 0.0
    %1381 = vmatmul.mubr.f32.gmra.mxu0 %v1312
    %v1382 = vpop.f32.mrf.mxu0
    %v1383 = vadd.f32 %v1145, %v1382
    %v1384 = vpop.f32.mrf.mxu0
    %1385 = vdwg.mxu0
    %v1386 = vsel %vm189, %v1383, -inf
    %1387 = vmax.xlane.f32.xlu0 %v1386
    %v1388 = vpop.xlane.xlu0 %1387
    %v1389 = vsub.f32 %v1383, %v1388
    %v1390 = vmul.f32 %v1389, 1.442695
    %v1391 = vpow.pop %v1390
    %v1392 = vsel %vm189, %v1391, 0.0
    %1393 = vadd.xlane.f32.xlu0 %v1392
    %v1394 = vpop.xlane.xlu0 %1393
    %v1395 = vrcp.pop %v1394
    %v1396 = vmul.f32 %v1391, %v1395
    %1397 = vrot.lane.b32.xlu0 %v175, 56
    %v1398 = vpop.permute.xlu0 %1397
    %v1401 = vsel %vm189, %v1396, 0
    %1403 = vmatprep.subr.mxu0 0.0
    %1404 = vmatpush1.msra.mxu0 0.0
    %1405 = vmatprep.subr.mxu0 0.0
    %1406 = vmatpush1.msra.mxu0 0.0
    %1407 = vmatprep.subr.mxu0 0.0
    %1408 = vmatpush1.msra.mxu0 0.0
    %1409 = vmatprep.subr.mxu0 0.0
    %1410 = vmatpush1.msra.mxu0 0.0
    %1411 = vmatprep.subr.mxu0 0.0
    %1412 = vmatpush1.msra.mxu0 0.0
    %1413 = vmatprep.subr.mxu0 0.0
    %1414 = vmatpush1.msra.mxu0 0.0
    %1415 = vmatprep.subr.mxu0 0.0
    %1416 = vmatpush1.msra.mxu0 0.0
    %1417 = vmatprep.subr.mxu0 0.0
    %1418 = vmatpush1.msra.mxu0 0.0
    %1419 = vmatprep.subr.mxu0 0.0
    %1420 = vmatpush1.msra.mxu0 0.0
    %1421 = vmatprep.subr.mxu0 0.0
    %1422 = vmatpush1.msra.mxu0 0.0
    %1423 = vmatprep.subr.mxu0 0.0
    %1424 = vmatpush1.msra.mxu0 0.0
    %1425 = vmatprep.subr.mxu0 0.0
    %1426 = vmatpush1.msra.mxu0 0.0
    %1427 = vmatprep.subr.mxu0 0.0
    %1428 = vmatpush1.msra.mxu0 0.0
    %1429 = vmatprep.subr.mxu0 0.0
    %1430 = vmatpush1.msra.mxu0 0.0
    %1431 = vmatprep.subr.mxu0 0.0
    %1432 = vmatpush1.msra.mxu0 0.0
    %1433 = vmatprep.subr.mxu0 0.0
    %1434 = vmatpush1.msra.mxu0 %v1398
    %1435 = vmatprep.subr.mxu0 0.0
    %1436 = vmatpush2.msra.mxu0 0.0
    %1437 = vmatprep.subr.mxu0 0.0
    %1438 = vmatpush2.msra.mxu0 0.0
    %1439 = vmatprep.subr.mxu0 0.0
    %1440 = vmatpush2.msra.mxu0 0.0
    %1441 = vmatprep.subr.mxu0 0.0
    %1442 = vmatpush2.msra.mxu0 0.0
    %1443 = vmatprep.subr.mxu0 0.0
    %1444 = vmatpush2.msra.mxu0 0.0
    %1445 = vmatprep.subr.mxu0 0.0
    %1446 = vmatpush2.msra.mxu0 0.0
    %1447 = vmatprep.subr.mxu0 0.0
    %1448 = vmatpush2.msra.mxu0 0.0
    %1449 = vmatprep.subr.mxu0 0.0
    %1450 = vmatpush2.msra.mxu0 0.0
    %1451 = vmatprep.subr.mxu0 0.0
    %1452 = vmatpush2.msra.mxu0 0.0
    %1453 = vmatprep.subr.mxu0 0.0
    %1454 = vmatpush2.msra.mxu0 0.0
    %1455 = vmatprep.subr.mxu0 0.0
    %1456 = vmatpush2.msra.mxu0 0.0
    %1457 = vmatprep.subr.mxu0 0.0
    %1458 = vmatpush2.msra.mxu0 0.0
    %1459 = vmatprep.subr.mxu0 0.0
    %1460 = vmatpush2.msra.mxu0 0.0
    %1461 = vmatprep.subr.mxu0 0.0
    %1462 = vmatpush2.msra.mxu0 0.0
    %1463 = vmatprep.subr.mxu0 0.0
    %1464 = vmatpush2.msra.mxu0 0.0
    %1465 = vmatprep.subr.mxu0 0.0
    %1466 = vmatpush2.msra.mxu0 0.0
    %1467 = vmatprep.mubr.f32.mxu0 0.0
    %1468 = vmatmul.mubr.f32.gmra.mxu0 %v1401
    %v1469 = vpop.f32.mrf.mxu0
    %v1470 = vadd.f32 0.0, %v1469
    %v1471 = vpop.f32.mrf.mxu0
    %1472 = vdwg.mxu0
    %v1474 = vsel %vm189, %v1470, 0
    %1476 = vmatprep.subr.mxu0 0.0
    %1477 = vmatpush1.msra.mxu0 0.0
    %1478 = vmatprep.subr.mxu0 0.0
    %1479 = vmatpush1.msra.mxu0 0.0
    %1480 = vmatprep.subr.mxu0 0.0
    %1481 = vmatpush1.msra.mxu0 0.0
    %1482 = vmatprep.subr.mxu0 0.0
    %1483 = vmatpush1.msra.mxu0 0.0
    %1484 = vmatprep.subr.mxu0 0.0
    %1485 = vmatpush1.msra.mxu0 0.0
    %1486 = vmatprep.subr.mxu0 0.0
    %1487 = vmatpush1.msra.mxu0 0.0
    %1488 = vmatprep.subr.mxu0 0.0
    %1489 = vmatpush1.msra.mxu0 0.0
    %1490 = vmatprep.subr.mxu0 0.0
    %1491 = vmatpush1.msra.mxu0 0.0
    %1492 = vmatprep.subr.mxu0 0.0
    %1493 = vmatpush1.msra.mxu0 0.0
    %1494 = vmatprep.subr.mxu0 0.0
    %1495 = vmatpush1.msra.mxu0 0.0
    %1496 = vmatprep.subr.mxu0 0.0
    %1497 = vmatpush1.msra.mxu0 0.0
    %1498 = vmatprep.subr.mxu0 0.0
    %1499 = vmatpush1.msra.mxu0 0.0
    %1500 = vmatprep.subr.mxu0 0.0
    %1501 = vmatpush1.msra.mxu0 0.0
    %1502 = vmatprep.subr.mxu0 0.0
    %1503 = vmatpush1.msra.mxu0 0.0
    %1504 = vmatprep.subr.mxu0 0.0
    %1505 = vmatpush1.msra.mxu0 0.0
    %1506 = vmatprep.subr.mxu0 0.0
    %1507 = vmatpush1.msra.mxu0 %v179
    %1508 = vmatprep.subr.mxu0 0.0
    %1509 = vmatpush2.msra.mxu0 0.0
    %1510 = vmatprep.subr.mxu0 0.0
    %1511 = vmatpush2.msra.mxu0 0.0
    %1512 = vmatprep.subr.mxu0 0.0
    %1513 = vmatpush2.msra.mxu0 0.0
    %1514 = vmatprep.subr.mxu0 0.0
    %1515 = vmatpush2.msra.mxu0 0.0
    %1516 = vmatprep.subr.mxu0 0.0
    %1517 = vmatpush2.msra.mxu0 0.0
    %1518 = vmatprep.subr.mxu0 0.0
    %1519 = vmatpush2.msra.mxu0 0.0
    %1520 = vmatprep.subr.mxu0 0.0
    %1521 = vmatpush2.msra.mxu0 0.0
    %1522 = vmatprep.subr.mxu0 0.0
    %1523 = vmatpush2.msra.mxu0 0.0
    %1524 = vmatprep.subr.mxu0 0.0
    %1525 = vmatpush2.msra.mxu0 0.0
    %1526 = vmatprep.subr.mxu0 0.0
    %1527 = vmatpush2.msra.mxu0 0.0
    %1528 = vmatprep.subr.mxu0 0.0
    %1529 = vmatpush2.msra.mxu0 0.0
    %1530 = vmatprep.subr.mxu0 0.0
    %1531 = vmatpush2.msra.mxu0 0.0
    %1532 = vmatprep.subr.mxu0 0.0
    %1533 = vmatpush2.msra.mxu0 0.0
    %1534 = vmatprep.subr.mxu0 0.0
    %1535 = vmatpush2.msra.mxu0 0.0
    %1536 = vmatprep.subr.mxu0 0.0
    %1537 = vmatpush2.msra.mxu0 0.0
    %1538 = vmatprep.subr.mxu0 0.0
    %1539 = vmatpush2.msra.mxu0 0.0
    %1540 = vmatprep.mubr.f32.mxu0 0.0
    %1541 = vmatmul.mubr.f32.gmra.mxu0 %v1474
    %v1542 = vpop.f32.mrf.mxu0
    %v1543 = vadd.f32 0.0, %v1542
    %v1544 = vpop.f32.mrf.mxu0
    %1545 = vdwg.mxu0
    %v1547 = vsel %vm189, %v1305, 0
    %1549 = vmatprep.subr.mxu0 0.0
    %1550 = vmatpush1.msra.mxu0 0.0
    %1551 = vmatprep.subr.mxu0 0.0
    %1552 = vmatpush1.msra.mxu0 0.0
    %1553 = vmatprep.subr.mxu0 0.0
    %1554 = vmatpush1.msra.mxu0 0.0
    %1555 = vmatprep.subr.mxu0 0.0
    %1556 = vmatpush1.msra.mxu0 0.0
    %1557 = vmatprep.subr.mxu0 0.0
    %1558 = vmatpush1.msra.mxu0 0.0
    %1559 = vmatprep.subr.mxu0 0.0
    %1560 = vmatpush1.msra.mxu0 0.0
    %1561 = vmatprep.subr.mxu0 0.0
    %1562 = vmatpush1.msra.mxu0 0.0
    %1563 = vmatprep.subr.mxu0 0.0
    %1564 = vmatpush1.msra.mxu0 0.0
    %1565 = vmatprep.subr.mxu0 0.0
    %1566 = vmatpush1.msra.mxu0 0.0
    %1567 = vmatprep.subr.mxu0 0.0
    %1568 = vmatpush1.msra.mxu0 0.0
    %1569 = vmatprep.subr.mxu0 0.0
    %1570 = vmatpush1.msra.mxu0 0.0
    %1571 = vmatprep.subr.mxu0 0.0
    %1572 = vmatpush1.msra.mxu0 0.0
    %1573 = vmatprep.subr.mxu0 0.0
    %1574 = vmatpush1.msra.mxu0 0.0
    %1575 = vmatprep.subr.mxu0 0.0
    %1576 = vmatpush1.msra.mxu0 0.0
    %1577 = vmatprep.subr.mxu0 0.0
    %1578 = vmatpush1.msra.mxu0 0.0
    %1579 = vmatprep.subr.mxu0 0.0
    %1580 = vmatpush1.msra.mxu0 %v178
    %1581 = vmatprep.subr.mxu0 0.0
    %1582 = vmatpush2.msra.mxu0 0.0
    %1583 = vmatprep.subr.mxu0 0.0
    %1584 = vmatpush2.msra.mxu0 0.0
    %1585 = vmatprep.subr.mxu0 0.0
    %1586 = vmatpush2.msra.mxu0 0.0
    %1587 = vmatprep.subr.mxu0 0.0
    %1588 = vmatpush2.msra.mxu0 0.0
    %1589 = vmatprep.subr.mxu0 0.0
    %1590 = vmatpush2.msra.mxu0 0.0
    %1591 = vmatprep.subr.mxu0 0.0
    %1592 = vmatpush2.msra.mxu0 0.0
    %1593 = vmatprep.subr.mxu0 0.0
    %1594 = vmatpush2.msra.mxu0 0.0
    %1595 = vmatprep.subr.mxu0 0.0
    %1596 = vmatpush2.msra.mxu0 0.0
    %1597 = vmatprep.subr.mxu0 0.0
    %1598 = vmatpush2.msra.mxu0 0.0
    %1599 = vmatprep.subr.mxu0 0.0
    %1600 = vmatpush2.msra.mxu0 0.0
    %1601 = vmatprep.subr.mxu0 0.0
    %1602 = vmatpush2.msra.mxu0 0.0
    %1603 = vmatprep.subr.mxu0 0.0
    %1604 = vmatpush2.msra.mxu0 0.0
    %1605 = vmatprep.subr.mxu0 0.0
    %1606 = vmatpush2.msra.mxu0 0.0
    %1607 = vmatprep.subr.mxu0 0.0
    %1608 = vmatpush2.msra.mxu0 0.0
    %1609 = vmatprep.subr.mxu0 0.0
    %1610 = vmatpush2.msra.mxu0 0.0
    %1611 = vmatprep.subr.mxu0 0.0
    %1612 = vmatpush2.msra.mxu0 0.0
    %1613 = vmatprep.mubr.f32.mxu0 0.0
    %1614 = vmatmul.mubr.f32.gmra.mxu0 %v1547
    %v1615 = vpop.f32.mrf.mxu0
    %v1616 = vadd.f32 %v1543, %v1615
    %v1617 = vpop.f32.mrf.mxu0
    %1618 = vdwg.mxu0
    %1619 = vrot.lane.b32.xlu0 %v175, 112
    %v1620 = vpop.permute.xlu0 %1619
    %1621 = vrot.lane.b32.xlu0 %v175, 80
    %v1622 = vpop.permute.xlu0 %1621
    %v1623 = vsel %vm189, %v1620, 0
    %v1625 = vsel %vm189, %v1622, 0
    %1627 = vmatprep.subr.mxu0 0.0
    %1628 = vmatpush1.xpose.msra.mxu0 0.0
    %1629 = vmatprep.subr.mxu0 0.0
    %1630 = vmatpush1.xpose.msra.mxu0 0.0
    %1631 = vmatprep.subr.mxu0 0.0
    %1632 = vmatpush1.xpose.msra.mxu0 0.0
    %1633 = vmatprep.subr.mxu0 0.0
    %1634 = vmatpush1.xpose.msra.mxu0 0.0
    %1635 = vmatprep.subr.mxu0 0.0
    %1636 = vmatpush1.xpose.msra.mxu0 0.0
    %1637 = vmatprep.subr.mxu0 0.0
    %1638 = vmatpush1.xpose.msra.mxu0 0.0
    %1639 = vmatprep.subr.mxu0 0.0
    %1640 = vmatpush1.xpose.msra.mxu0 0.0
    %1641 = vmatprep.subr.mxu0 0.0
    %1642 = vmatpush1.xpose.msra.mxu0 0.0
    %1643 = vmatprep.subr.mxu0 0.0
    %1644 = vmatpush1.xpose.msra.mxu0 0.0
    %1645 = vmatprep.subr.mxu0 0.0
    %1646 = vmatpush1.xpose.msra.mxu0 0.0
    %1647 = vmatprep.subr.mxu0 0.0
    %1648 = vmatpush1.xpose.msra.mxu0 0.0
    %1649 = vmatprep.subr.mxu0 0.0
    %1650 = vmatpush1.xpose.msra.mxu0 0.0
    %1651 = vmatprep.subr.mxu0 0.0
    %1652 = vmatpush1.xpose.msra.mxu0 0.0
    %1653 = vmatprep.subr.mxu0 0.0
    %1654 = vmatpush1.xpose.msra.mxu0 0.0
    %1655 = vmatprep.subr.mxu0 0.0
    %1656 = vmatpush1.xpose.msra.mxu0 0.0
    %1657 = vmatprep.subr.mxu0 0.0
    %1658 = vmatpush1.xpose.msra.mxu0 %v1625
    %1659 = vmatprep.subr.mxu0 0.0
    %1660 = vmatpush2.xpose.msra.mxu0 0.0
    %1661 = vmatprep.subr.mxu0 0.0
    %1662 = vmatpush2.xpose.msra.mxu0 0.0
    %1663 = vmatprep.subr.mxu0 0.0
    %1664 = vmatpush2.xpose.msra.mxu0 0.0
    %1665 = vmatprep.subr.mxu0 0.0
    %1666 = vmatpush2.xpose.msra.mxu0 0.0
    %1667 = vmatprep.subr.mxu0 0.0
    %1668 = vmatpush2.xpose.msra.mxu0 0.0
    %1669 = vmatprep.subr.mxu0 0.0
    %1670 = vmatpush2.xpose.msra.mxu0 0.0
    %1671 = vmatprep.subr.mxu0 0.0
    %1672 = vmatpush2.xpose.msra.mxu0 0.0
    %1673 = vmatprep.subr.mxu0 0.0
    %1674 = vmatpush2.xpose.msra.mxu0 0.0
    %1675 = vmatprep.subr.mxu0 0.0
    %1676 = vmatpush2.xpose.msra.mxu0 0.0
    %1677 = vmatprep.subr.mxu0 0.0
    %1678 = vmatpush2.xpose.msra.mxu0 0.0
    %1679 = vmatprep.subr.mxu0 0.0
    %1680 = vmatpush2.xpose.msra.mxu0 0.0
    %1681 = vmatprep.subr.mxu0 0.0
    %1682 = vmatpush2.xpose.msra.mxu0 0.0
    %1683 = vmatprep.subr.mxu0 0.0
    %1684 = vmatpush2.xpose.msra.mxu0 0.0
    %1685 = vmatprep.subr.mxu0 0.0
    %1686 = vmatpush2.xpose.msra.mxu0 0.0
    %1687 = vmatprep.subr.mxu0 0.0
    %1688 = vmatpush2.xpose.msra.mxu0 0.0
    %1689 = vmatprep.subr.mxu0 0.0
    %1690 = vmatpush2.xpose.msra.mxu0 0.0
    %1691 = vmatprep.mubr.f32.mxu0 0.0
    %1692 = vmatmul.mubr.f32.gmra.mxu0 %v1623
    %v1693 = vpop.f32.mrf.mxu0
    %v1694 = vadd.f32 %v1145, %v1693
    %v1695 = vpop.f32.mrf.mxu0
    %1696 = vdwg.mxu0
    %v1697 = vsel %vm189, %v1694, -inf
    %1698 = vmax.xlane.f32.xlu0 %v1697
    %v1699 = vpop.xlane.xlu0 %1698
    %v1700 = vsub.f32 %v1694, %v1699
    %v1701 = vmul.f32 %v1700, 1.442695
    %v1702 = vpow.pop %v1701
    %v1703 = vsel %vm189, %v1702, 0.0
    %1704 = vadd.xlane.f32.xlu0 %v1703
    %v1705 = vpop.xlane.xlu0 %1704
    %v1706 = vrcp.pop %v1705
    %v1707 = vmul.f32 %v1702, %v1706
    %1708 = vrot.lane.b32.xlu0 %v175, 48
    %v1709 = vpop.permute.xlu0 %1708
    %v1712 = vsel %vm189, %v1707, 0
    %1714 = vmatprep.subr.mxu0 0.0
    %1715 = vmatpush1.msra.mxu0 0.0
    %1716 = vmatprep.subr.mxu0 0.0
    %1717 = vmatpush1.msra.mxu0 0.0
    %1718 = vmatprep.subr.mxu0 0.0
    %1719 = vmatpush1.msra.mxu0 0.0
    %1720 = vmatprep.subr.mxu0 0.0
    %1721 = vmatpush1.msra.mxu0 0.0
    %1722 = vmatprep.subr.mxu0 0.0
    %1723 = vmatpush1.msra.mxu0 0.0
    %1724 = vmatprep.subr.mxu0 0.0
    %1725 = vmatpush1.msra.mxu0 0.0
    %1726 = vmatprep.subr.mxu0 0.0
    %1727 = vmatpush1.msra.mxu0 0.0
    %1728 = vmatprep.subr.mxu0 0.0
    %1729 = vmatpush1.msra.mxu0 0.0
    %1730 = vmatprep.subr.mxu0 0.0
    %1731 = vmatpush1.msra.mxu0 0.0
    %1732 = vmatprep.subr.mxu0 0.0
    %1733 = vmatpush1.msra.mxu0 0.0
    %1734 = vmatprep.subr.mxu0 0.0
    %1735 = vmatpush1.msra.mxu0 0.0
    %1736 = vmatprep.subr.mxu0 0.0
    %1737 = vmatpush1.msra.mxu0 0.0
    %1738 = vmatprep.subr.mxu0 0.0
    %1739 = vmatpush1.msra.mxu0 0.0
    %1740 = vmatprep.subr.mxu0 0.0
    %1741 = vmatpush1.msra.mxu0 0.0
    %1742 = vmatprep.subr.mxu0 0.0
    %1743 = vmatpush1.msra.mxu0 0.0
    %1744 = vmatprep.subr.mxu0 0.0
    %1745 = vmatpush1.msra.mxu0 %v1709
    %1746 = vmatprep.subr.mxu0 0.0
    %1747 = vmatpush2.msra.mxu0 0.0
    %1748 = vmatprep.subr.mxu0 0.0
    %1749 = vmatpush2.msra.mxu0 0.0
    %1750 = vmatprep.subr.mxu0 0.0
    %1751 = vmatpush2.msra.mxu0 0.0
    %1752 = vmatprep.subr.mxu0 0.0
    %1753 = vmatpush2.msra.mxu0 0.0
    %1754 = vmatprep.subr.mxu0 0.0
    %1755 = vmatpush2.msra.mxu0 0.0
    %1756 = vmatprep.subr.mxu0 0.0
    %1757 = vmatpush2.msra.mxu0 0.0
    %1758 = vmatprep.subr.mxu0 0.0
    %1759 = vmatpush2.msra.mxu0 0.0
    %1760 = vmatprep.subr.mxu0 0.0
    %1761 = vmatpush2.msra.mxu0 0.0
    %1762 = vmatprep.subr.mxu0 0.0
    %1763 = vmatpush2.msra.mxu0 0.0
    %1764 = vmatprep.subr.mxu0 0.0
    %1765 = vmatpush2.msra.mxu0 0.0
    %1766 = vmatprep.subr.mxu0 0.0
    %1767 = vmatpush2.msra.mxu0 0.0
    %1768 = vmatprep.subr.mxu0 0.0
    %1769 = vmatpush2.msra.mxu0 0.0
    %1770 = vmatprep.subr.mxu0 0.0
    %1771 = vmatpush2.msra.mxu0 0.0
    %1772 = vmatprep.subr.mxu0 0.0
    %1773 = vmatpush2.msra.mxu0 0.0
    %1774 = vmatprep.subr.mxu0 0.0
    %1775 = vmatpush2.msra.mxu0 0.0
    %1776 = vmatprep.subr.mxu0 0.0
    %1777 = vmatpush2.msra.mxu0 0.0
    %1778 = vmatprep.mubr.f32.mxu0 0.0
    %1779 = vmatmul.mubr.f32.gmra.mxu0 %v1712
    %v1780 = vpop.f32.mrf.mxu0
    %v1781 = vadd.f32 0.0, %v1780
    %v1782 = vpop.f32.mrf.mxu0
    %1783 = vdwg.mxu0
    %v1785 = vsel %vm189, %v1781, 0
    %1787 = vmatprep.subr.mxu0 0.0
    %1788 = vmatpush1.msra.mxu0 0.0
    %1789 = vmatprep.subr.mxu0 0.0
    %1790 = vmatpush1.msra.mxu0 0.0
    %1791 = vmatprep.subr.mxu0 0.0
    %1792 = vmatpush1.msra.mxu0 0.0
    %1793 = vmatprep.subr.mxu0 0.0
    %1794 = vmatpush1.msra.mxu0 0.0
    %1795 = vmatprep.subr.mxu0 0.0
    %1796 = vmatpush1.msra.mxu0 0.0
    %1797 = vmatprep.subr.mxu0 0.0
    %1798 = vmatpush1.msra.mxu0 0.0
    %1799 = vmatprep.subr.mxu0 0.0
    %1800 = vmatpush1.msra.mxu0 0.0
    %1801 = vmatprep.subr.mxu0 0.0
    %1802 = vmatpush1.msra.mxu0 0.0
    %1803 = vmatprep.subr.mxu0 0.0
    %1804 = vmatpush1.msra.mxu0 0.0
    %1805 = vmatprep.subr.mxu0 0.0
    %1806 = vmatpush1.msra.mxu0 0.0
    %1807 = vmatprep.subr.mxu0 0.0
    %1808 = vmatpush1.msra.mxu0 0.0
    %1809 = vmatprep.subr.mxu0 0.0
    %1810 = vmatpush1.msra.mxu0 0.0
    %1811 = vmatprep.subr.mxu0 0.0
    %1812 = vmatpush1.msra.mxu0 0.0
    %1813 = vmatprep.subr.mxu0 0.0
    %1814 = vmatpush1.msra.mxu0 0.0
    %1815 = vmatprep.subr.mxu0 0.0
    %1816 = vmatpush1.msra.mxu0 0.0
    %1817 = vmatprep.subr.mxu0 0.0
    %1818 = vmatpush1.msra.mxu0 %v180
    %1819 = vmatprep.subr.mxu0 0.0
    %1820 = vmatpush2.msra.mxu0 0.0
    %1821 = vmatprep.subr.mxu0 0.0
    %1822 = vmatpush2.msra.mxu0 0.0
    %1823 = vmatprep.subr.mxu0 0.0
    %1824 = vmatpush2.msra.mxu0 0.0
    %1825 = vmatprep.subr.mxu0 0.0
    %1826 = vmatpush2.msra.mxu0 0.0
    %1827 = vmatprep.subr.mxu0 0.0
    %1828 = vmatpush2.msra.mxu0 0.0
    %1829 = vmatprep.subr.mxu0 0.0
    %1830 = vmatpush2.msra.mxu0 0.0
    %1831 = vmatprep.subr.mxu0 0.0
    %1832 = vmatpush2.msra.mxu0 0.0
    %1833 = vmatprep.subr.mxu0 0.0
    %1834 = vmatpush2.msra.mxu0 0.0
    %1835 = vmatprep.subr.mxu0 0.0
    %1836 = vmatpush2.msra.mxu0 0.0
    %1837 = vmatprep.subr.mxu0 0.0
    %1838 = vmatpush2.msra.mxu0 0.0
    %1839 = vmatprep.subr.mxu0 0.0
    %1840 = vmatpush2.msra.mxu0 0.0
    %1841 = vmatprep.subr.mxu0 0.0
    %1842 = vmatpush2.msra.mxu0 0.0
    %1843 = vmatprep.subr.mxu0 0.0
    %1844 = vmatpush2.msra.mxu0 0.0
    %1845 = vmatprep.subr.mxu0 0.0
    %1846 = vmatpush2.msra.mxu0 0.0
    %1847 = vmatprep.subr.mxu0 0.0
    %1848 = vmatpush2.msra.mxu0 0.0
    %1849 = vmatprep.subr.mxu0 0.0
    %1850 = vmatpush2.msra.mxu0 0.0
    %1851 = vmatprep.mubr.f32.mxu0 0.0
    %1852 = vmatmul.mubr.f32.gmra.mxu0 %v1785
    %v1853 = vpop.f32.mrf.mxu0
    %v1854 = vadd.f32 0.0, %v1853
    %v1855 = vpop.f32.mrf.mxu0
    %1856 = vdwg.mxu0
    %v1857 = vadd.f32 %v1616, %v1854
    %1858 = vrot.lane.b32.xlu0 %v175, 104
    %v1859 = vpop.permute.xlu0 %1858
    %1860 = vrot.lane.b32.xlu0 %v175, 72
    %v1861 = vpop.permute.xlu0 %1860
    %v1862 = vsel %vm189, %v1859, 0
    %v1864 = vsel %vm189, %v1861, 0
    %1866 = vmatprep.subr.mxu0 0.0
    %1867 = vmatpush1.xpose.msra.mxu0 0.0
    %1868 = vmatprep.subr.mxu0 0.0
    %1869 = vmatpush1.xpose.msra.mxu0 0.0
    %1870 = vmatprep.subr.mxu0 0.0
    %1871 = vmatpush1.xpose.msra.mxu0 0.0
    %1872 = vmatprep.subr.mxu0 0.0
    %1873 = vmatpush1.xpose.msra.mxu0 0.0
    %1874 = vmatprep.subr.mxu0 0.0
    %1875 = vmatpush1.xpose.msra.mxu0 0.0
    %1876 = vmatprep.subr.mxu0 0.0
    %1877 = vmatpush1.xpose.msra.mxu0 0.0
    %1878 = vmatprep.subr.mxu0 0.0
    %1879 = vmatpush1.xpose.msra.mxu0 0.0
    %1880 = vmatprep.subr.mxu0 0.0
    %1881 = vmatpush1.xpose.msra.mxu0 0.0
    %1882 = vmatprep.subr.mxu0 0.0
    %1883 = vmatpush1.xpose.msra.mxu0 0.0
    %1884 = vmatprep.subr.mxu0 0.0
    %1885 = vmatpush1.xpose.msra.mxu0 0.0
    %1886 = vmatprep.subr.mxu0 0.0
    %1887 = vmatpush1.xpose.msra.mxu0 0.0
    %1888 = vmatprep.subr.mxu0 0.0
    %1889 = vmatpush1.xpose.msra.mxu0 0.0
    %1890 = vmatprep.subr.mxu0 0.0
    %1891 = vmatpush1.xpose.msra.mxu0 0.0
    %1892 = vmatprep.subr.mxu0 0.0
    %1893 = vmatpush1.xpose.msra.mxu0 0.0
    %1894 = vmatprep.subr.mxu0 0.0
    %1895 = vmatpush1.xpose.msra.mxu0 0.0
    %1896 = vmatprep.subr.mxu0 0.0
    %1897 = vmatpush1.xpose.msra.mxu0 %v1864
    %1898 = vmatprep.subr.mxu0 0.0
    %1899 = vmatpush2.xpose.msra.mxu0 0.0
    %1900 = vmatprep.subr.mxu0 0.0
    %1901 = vmatpush2.xpose.msra.mxu0 0.0
    %1902 = vmatprep.subr.mxu0 0.0
    %1903 = vmatpush2.xpose.msra.mxu0 0.0
    %1904 = vmatprep.subr.mxu0 0.0
    %1905 = vmatpush2.xpose.msra.mxu0 0.0
    %1906 = vmatprep.subr.mxu0 0.0
    %1907 = vmatpush2.xpose.msra.mxu0 0.0
    %1908 = vmatprep.subr.mxu0 0.0
    %1909 = vmatpush2.xpose.msra.mxu0 0.0
    %1910 = vmatprep.subr.mxu0 0.0
    %1911 = vmatpush2.xpose.msra.mxu0 0.0
    %1912 = vmatprep.subr.mxu0 0.0
    %1913 = vmatpush2.xpose.msra.mxu0 0.0
    %1914 = vmatprep.subr.mxu0 0.0
    %1915 = vmatpush2.xpose.msra.mxu0 0.0
    %1916 = vmatprep.subr.mxu0 0.0
    %1917 = vmatpush2.xpose.msra.mxu0 0.0
    %1918 = vmatprep.subr.mxu0 0.0
    %1919 = vmatpush2.xpose.msra.mxu0 0.0
    %1920 = vmatprep.subr.mxu0 0.0
    %1921 = vmatpush2.xpose.msra.mxu0 0.0
    %1922 = vmatprep.subr.mxu0 0.0
    %1923 = vmatpush2.xpose.msra.mxu0 0.0
    %1924 = vmatprep.subr.mxu0 0.0
    %1925 = vmatpush2.xpose.msra.mxu0 0.0
    %1926 = vmatprep.subr.mxu0 0.0
    %1927 = vmatpush2.xpose.msra.mxu0 0.0
    %1928 = vmatprep.subr.mxu0 0.0
    %1929 = vmatpush2.xpose.msra.mxu0 0.0
    %1930 = vmatprep.mubr.f32.mxu0 0.0
    %1931 = vmatmul.mubr.f32.gmra.mxu0 %v1862
    %v1932 = vpop.f32.mrf.mxu0
    %v1933 = vadd.f32 %v1145, %v1932
    %v1934 = vpop.f32.mrf.mxu0
    %1935 = vdwg.mxu0
    %v1936 = vsel %vm189, %v1933, -inf
    %1937 = vmax.xlane.f32.xlu0 %v1936
    %v1938 = vpop.xlane.xlu0 %1937
    %v1939 = vsub.f32 %v1933, %v1938
    %v1940 = vmul.f32 %v1939, 1.442695
    %v1941 = vpow.pop %v1940
    %v1942 = vsel %vm189, %v1941, 0.0
    %1943 = vadd.xlane.f32.xlu0 %v1942
    %v1944 = vpop.xlane.xlu0 %1943
    %v1945 = vrcp.pop %v1944
    %v1946 = vmul.f32 %v1941, %v1945
    %1947 = vrot.lane.b32.xlu0 %v175, 40
    %v1948 = vpop.permute.xlu0 %1947
    %v1951 = vsel %vm189, %v1946, 0
    %1953 = vmatprep.subr.mxu0 0.0
    %1954 = vmatpush1.msra.mxu0 0.0
    %1955 = vmatprep.subr.mxu0 0.0
    %1956 = vmatpush1.msra.mxu0 0.0
    %1957 = vmatprep.subr.mxu0 0.0
    %1958 = vmatpush1.msra.mxu0 0.0
    %1959 = vmatprep.subr.mxu0 0.0
    %1960 = vmatpush1.msra.mxu0 0.0
    %1961 = vmatprep.subr.mxu0 0.0
    %1962 = vmatpush1.msra.mxu0 0.0
    %1963 = vmatprep.subr.mxu0 0.0
    %1964 = vmatpush1.msra.mxu0 0.0
    %1965 = vmatprep.subr.mxu0 0.0
    %1966 = vmatpush1.msra.mxu0 0.0
    %1967 = vmatprep.subr.mxu0 0.0
    %1968 = vmatpush1.msra.mxu0 0.0
    %1969 = vmatprep.subr.mxu0 0.0
    %1970 = vmatpush1.msra.mxu0 0.0
    %1971 = vmatprep.subr.mxu0 0.0
    %1972 = vmatpush1.msra.mxu0 0.0
    %1973 = vmatprep.subr.mxu0 0.0
    %1974 = vmatpush1.msra.mxu0 0.0
    %1975 = vmatprep.subr.mxu0 0.0
    %1976 = vmatpush1.msra.mxu0 0.0
    %1977 = vmatprep.subr.mxu0 0.0
    %1978 = vmatpush1.msra.mxu0 0.0
    %1979 = vmatprep.subr.mxu0 0.0
    %1980 = vmatpush1.msra.mxu0 0.0
    %1981 = vmatprep.subr.mxu0 0.0
    %1982 = vmatpush1.msra.mxu0 0.0
    %1983 = vmatprep.subr.mxu0 0.0
    %1984 = vmatpush1.msra.mxu0 %v1948
    %1985 = vmatprep.subr.mxu0 0.0
    %1986 = vmatpush2.msra.mxu0 0.0
    %1987 = vmatprep.subr.mxu0 0.0
    %1988 = vmatpush2.msra.mxu0 0.0
    %1989 = vmatprep.subr.mxu0 0.0
    %1990 = vmatpush2.msra.mxu0 0.0
    %1991 = vmatprep.subr.mxu0 0.0
    %1992 = vmatpush2.msra.mxu0 0.0
    %1993 = vmatprep.subr.mxu0 0.0
    %1994 = vmatpush2.msra.mxu0 0.0
    %1995 = vmatprep.subr.mxu0 0.0
    %1996 = vmatpush2.msra.mxu0 0.0
    %1997 = vmatprep.subr.mxu0 0.0
    %1998 = vmatpush2.msra.mxu0 0.0
    %1999 = vmatprep.subr.mxu0 0.0
    %2000 = vmatpush2.msra.mxu0 0.0
    %2001 = vmatprep.subr.mxu0 0.0
    %2002 = vmatpush2.msra.mxu0 0.0
    %2003 = vmatprep.subr.mxu0 0.0
    %2004 = vmatpush2.msra.mxu0 0.0
    %2005 = vmatprep.subr.mxu0 0.0
    %2006 = vmatpush2.msra.mxu0 0.0
    %2007 = vmatprep.subr.mxu0 0.0
    %2008 = vmatpush2.msra.mxu0 0.0
    %2009 = vmatprep.subr.mxu0 0.0
    %2010 = vmatpush2.msra.mxu0 0.0
    %2011 = vmatprep.subr.mxu0 0.0
    %2012 = vmatpush2.msra.mxu0 0.0
    %2013 = vmatprep.subr.mxu0 0.0
    %2014 = vmatpush2.msra.mxu0 0.0
    %2015 = vmatprep.subr.mxu0 0.0
    %2016 = vmatpush2.msra.mxu0 0.0
    %2017 = vmatprep.mubr.f32.mxu0 0.0
    %2018 = vmatmul.mubr.f32.gmra.mxu0 %v1951
    %v2019 = vpop.f32.mrf.mxu0
    %v2020 = vadd.f32 0.0, %v2019
    %v2021 = vpop.f32.mrf.mxu0
    %2022 = vdwg.mxu0
    %v2024 = vsel %vm189, %v2020, 0
    %2026 = vmatprep.subr.mxu0 0.0
    %2027 = vmatpush1.msra.mxu0 0.0
    %2028 = vmatprep.subr.mxu0 0.0
    %2029 = vmatpush1.msra.mxu0 0.0
    %2030 = vmatprep.subr.mxu0 0.0
    %2031 = vmatpush1.msra.mxu0 0.0
    %2032 = vmatprep.subr.mxu0 0.0
    %2033 = vmatpush1.msra.mxu0 0.0
    %2034 = vmatprep.subr.mxu0 0.0
    %2035 = vmatpush1.msra.mxu0 0.0
    %2036 = vmatprep.subr.mxu0 0.0
    %2037 = vmatpush1.msra.mxu0 0.0
    %2038 = vmatprep.subr.mxu0 0.0
    %2039 = vmatpush1.msra.mxu0 0.0
    %2040 = vmatprep.subr.mxu0 0.0
    %2041 = vmatpush1.msra.mxu0 0.0
    %2042 = vmatprep.subr.mxu0 0.0
    %2043 = vmatpush1.msra.mxu0 0.0
    %2044 = vmatprep.subr.mxu0 0.0
    %2045 = vmatpush1.msra.mxu0 0.0
    %2046 = vmatprep.subr.mxu0 0.0
    %2047 = vmatpush1.msra.mxu0 0.0
    %2048 = vmatprep.subr.mxu0 0.0
    %2049 = vmatpush1.msra.mxu0 0.0
    %2050 = vmatprep.subr.mxu0 0.0
    %2051 = vmatpush1.msra.mxu0 0.0
    %2052 = vmatprep.subr.mxu0 0.0
    %2053 = vmatpush1.msra.mxu0 0.0
    %2054 = vmatprep.subr.mxu0 0.0
    %2055 = vmatpush1.msra.mxu0 0.0
    %2056 = vmatprep.subr.mxu0 0.0
    %2057 = vmatpush1.msra.mxu0 %v181
    %2058 = vmatprep.subr.mxu0 0.0
    %2059 = vmatpush2.msra.mxu0 0.0
    %2060 = vmatprep.subr.mxu0 0.0
    %2061 = vmatpush2.msra.mxu0 0.0
    %2062 = vmatprep.subr.mxu0 0.0
    %2063 = vmatpush2.msra.mxu0 0.0
    %2064 = vmatprep.subr.mxu0 0.0
    %2065 = vmatpush2.msra.mxu0 0.0
    %2066 = vmatprep.subr.mxu0 0.0
    %2067 = vmatpush2.msra.mxu0 0.0
    %2068 = vmatprep.subr.mxu0 0.0
    %2069 = vmatpush2.msra.mxu0 0.0
    %2070 = vmatprep.subr.mxu0 0.0
    %2071 = vmatpush2.msra.mxu0 0.0
    %2072 = vmatprep.subr.mxu0 0.0
    %2073 = vmatpush2.msra.mxu0 0.0
    %2074 = vmatprep.subr.mxu0 0.0
    %2075 = vmatpush2.msra.mxu0 0.0
    %2076 = vmatprep.subr.mxu0 0.0
    %2077 = vmatpush2.msra.mxu0 0.0
    %2078 = vmatprep.subr.mxu0 0.0
    %2079 = vmatpush2.msra.mxu0 0.0
    %2080 = vmatprep.subr.mxu0 0.0
    %2081 = vmatpush2.msra.mxu0 0.0
    %2082 = vmatprep.subr.mxu0 0.0
    %2083 = vmatpush2.msra.mxu0 0.0
    %2084 = vmatprep.subr.mxu0 0.0
    %2085 = vmatpush2.msra.mxu0 0.0
    %2086 = vmatprep.subr.mxu0 0.0
    %2087 = vmatpush2.msra.mxu0 0.0
    %2088 = vmatprep.subr.mxu0 0.0
    %2089 = vmatpush2.msra.mxu0 0.0
    %2090 = vmatprep.mubr.f32.mxu0 0.0
    %2091 = vmatmul.mubr.f32.gmra.mxu0 %v2024
    %v2092 = vpop.f32.mrf.mxu0
    %v2093 = vadd.f32 0.0, %v2092
    %v2094 = vpop.f32.mrf.mxu0
    %2095 = vdwg.mxu0
    %v2096 = vadd.f32 %v1857, %v2093
    %v2097 = vadd.f32 %v24, %v1139
    %v2098 = vadd.f32 %v25, %v2096
    %v2099 = vlaneseq
    %v2100 = vshrl.u32 %v2099, 7
    %v2101 = vsub.s32 0, %v2100
    %v2102 = vrot.slane %v30, %v2101
    %v2103 = vadd.f32 %v2097, %v2102
    %v2104 = vadd.f32 %v2098, %v2102
    %v2105 = vsel %vm35, %v2103, 0.0
    %2106 = vadd.xlane.f32.xlu0 %v2105
    %v2107 = vpop.xlane.xlu0 %2106
    %v2108 = vsel %vm35, %v2104, 0.0
    %2109 = vadd.xlane.f32.xlu0 %v2108
    %v2110 = vpop.xlane.xlu0 %2109
    %v2111 = vmul.f32 %v2107, %v42
    %v2112 = vmul.f32 %v2110, %v42
    %v2113 = vsub.f32 %v2103, %v2111
    %v2114 = vsub.f32 %v2104, %v2112
    %v2115 = vmul.f32 %v2113, %v2113
    %v2116 = vmul.f32 %v2114, %v2114
    %v2117 = vsel %vm35, %v2115, 0.0
    %2118 = vadd.xlane.f32.xlu0 %v2117
    %v2119 = vpop.xlane.xlu0 %2118
    %v2120 = vsel %vm35, %v2116, 0.0
    %2121 = vadd.xlane.f32.xlu0 %v2120
    %v2122 = vpop.xlane.xlu0 %2121
    %v2123 = vmul.f32 %v2119, 0.032258064
    %v2124 = vmul.f32 %v2122, 0.032258064
    %v2125 = vrsqrt.pop %v2123
    %v2126 = vmul.f32 %v2123, %v2125
    %vm2127 = vcmp.eq.f32.partialorder %v2123, inf
    %v2128 = vsel %vm2127, %v2123, %v2126
    %vm2129 = vcmp.eq.f32.partialorder %v2123, 0.0
    %v2130 = vand.u32 %v2123, 2147483648
    %v2131 = vsel %vm2129, %v2130, %v2128
    %v2132 = vrsqrt.pop %v2124
    %v2133 = vmul.f32 %v2124, %v2132
    %vm2134 = vcmp.eq.f32.partialorder %v2124, inf
    %v2135 = vsel %vm2134, %v2124, %v2133
    %vm2136 = vcmp.eq.f32.partialorder %v2124, 0.0
    %v2137 = vand.u32 %v2124, 2147483648
    %v2138 = vsel %vm2136, %v2137, %v2135
    %v2139 = vadd.f32 %v2131, 1e-06
    %v2140 = vadd.f32 %v2138, 1e-06
    %v2141 = vrcp.pop %v2139
    %v2142 = vmul.f32 %v2113, %v2141
    %v2143 = vrcp.pop %v2140
    %v2144 = vmul.f32 %v2114, %v2143
    %v2145 = vlaneseq
    %v2146 = vshrl.u32 %v2145, 7
    %v2147 = vsub.s32 0, %v2146
    %v2148 = vrot.slane %v28, %v2147
    %v2149 = vmul.f32 %v2148, %v2142
    %v2150 = vmul.f32 %v2148, %v2144
    %v2151 = vlaneseq
    %v2152 = vshrl.u32 %v2151, 7
    %v2153 = vsub.s32 0, %v2152
    %v2154 = vrot.slane %v29, %v2153
    %v2155 = vadd.f32 %v2149, %v2154
    %v2156 = vadd.f32 %v2150, %v2154
    %v2157 = vld [vmem:[%s4] sm:$0xff]
    %v2158 = vld [vmem:[%s4 + $0x8] sm:$0xff]
    %v2159 = vld [vmem:[%s4 + $0x10] sm:$0xff]
    %v2160 = vld [vmem:[%s4 + $0x18] sm:$0xff]
    %v2161 = vlaneseq
    %v2162 = vshrl.u32 %v2161, 7
    %v2163 = vsub.s32 0, %v2162
    %v2164 = vrot.slane %v32, %v2163
    %v2166 = vsel %vm35, %v2155, 0
    %v2169 = vsel %vm35, %v2156, 0
    %2171 = vmatprep.subr.mxu0 0.0
    %2172 = vmatpush1.msra.mxu0 0.0
    %2173 = vmatprep.subr.mxu0 0.0
    %2174 = vmatpush1.msra.mxu0 0.0
    %2175 = vmatprep.subr.mxu0 0.0
    %2176 = vmatpush1.msra.mxu0 0.0
    %2177 = vmatprep.subr.mxu0 0.0
    %2178 = vmatpush1.msra.mxu0 0.0
    %2179 = vmatprep.subr.mxu0 0.0
    %2180 = vmatpush1.msra.mxu0 0.0
    %2181 = vmatprep.subr.mxu0 0.0
    %2182 = vmatpush1.msra.mxu0 0.0
    %2183 = vmatprep.subr.mxu0 0.0
    %2184 = vmatpush1.msra.mxu0 0.0
    %2185 = vmatprep.subr.mxu0 0.0
    %2186 = vmatpush1.msra.mxu0 0.0
    %2187 = vmatprep.subr.mxu0 0.0
    %2188 = vmatpush1.msra.mxu0 0.0
    %2189 = vmatprep.subr.mxu0 0.0
    %2190 = vmatpush1.msra.mxu0 0.0
    %2191 = vmatprep.subr.mxu0 0.0
    %2192 = vmatpush1.msra.mxu0 0.0
    %2193 = vmatprep.subr.mxu0 0.0
    %2194 = vmatpush1.msra.mxu0 0.0
    %2195 = vmatprep.subr.mxu0 0.0
    %2196 = vmatpush1.msra.mxu0 %v2160
    %2197 = vmatprep.subr.mxu0 0.0
    %2198 = vmatpush1.msra.mxu0 %v2159
    %2199 = vmatprep.subr.mxu0 0.0
    %2200 = vmatpush1.msra.mxu0 %v2158
    %2201 = vmatprep.subr.mxu0 0.0
    %2202 = vmatpush1.msra.mxu0 %v2157
    %2203 = vmatprep.subr.mxu0 0.0
    %2204 = vmatpush2.msra.mxu0 0.0
    %2205 = vmatprep.subr.mxu0 0.0
    %2206 = vmatpush2.msra.mxu0 0.0
    %2207 = vmatprep.subr.mxu0 0.0
    %2208 = vmatpush2.msra.mxu0 0.0
    %2209 = vmatprep.subr.mxu0 0.0
    %2210 = vmatpush2.msra.mxu0 0.0
    %2211 = vmatprep.subr.mxu0 0.0
    %2212 = vmatpush2.msra.mxu0 0.0
    %2213 = vmatprep.subr.mxu0 0.0
    %2214 = vmatpush2.msra.mxu0 0.0
    %2215 = vmatprep.subr.mxu0 0.0
    %2216 = vmatpush2.msra.mxu0 0.0
    %2217 = vmatprep.subr.mxu0 0.0
    %2218 = vmatpush2.msra.mxu0 0.0
    %2219 = vmatprep.subr.mxu0 0.0
    %2220 = vmatpush2.msra.mxu0 0.0
    %2221 = vmatprep.subr.mxu0 0.0
    %2222 = vmatpush2.msra.mxu0 0.0
    %2223 = vmatprep.subr.mxu0 0.0
    %2224 = vmatpush2.msra.mxu0 0.0
    %2225 = vmatprep.subr.mxu0 0.0
    %2226 = vmatpush2.msra.mxu0 0.0
    %2227 = vmatprep.subr.mxu0 0.0
    %2228 = vmatpush2.msra.mxu0 0.0
    %2229 = vmatprep.subr.mxu0 0.0
    %2230 = vmatpush2.msra.mxu0 0.0
    %2231 = vmatprep.subr.mxu0 0.0
    %2232 = vmatpush2.msra.mxu0 0.0
    %2233 = vmatprep.subr.mxu0 0.0
    %2234 = vmatpush2.msra.mxu0 0.0
    %2235 = vmatprep.mubr.f32.mxu0 0.0
    %2236 = vmatmul.mubr.f32.gmra.mxu0 %v2166
    %v2237 = vpop.f32.mrf.mxu0
    %v2238 = vadd.f32 %v2164, %v2237
    %v2239 = vpop.f32.mrf.mxu0
    %2240 = vmatprep.mubr.f32.mxu0 0.0
    %2241 = vmatmul.mubr.f32.gmra.mxu0 %v2169
    %v2242 = vpop.f32.mrf.mxu0
    %v2243 = vadd.f32 %v2164, %v2242
    %v2244 = vpop.f32.mrf.mxu0
    %2245 = vdwg.mxu0
    %v2246 = vmax.f32 %v2238, 0.0
    %v2247 = vmax.f32 %v2243, 0.0
    %v2248 = vld [vmem:[%s5] sm:$0xff]
    %v2249 = vld [vmem:[%s5 + $0x8] sm:$0xff]
    %v2250 = vld [vmem:[%s5 + $0x10] sm:$0xff]
    %v2251 = vld [vmem:[%s5 + $0x18] sm:$0xff]
    %v2252 = vld [vmem:[%s5 + $0x20] sm:$0xff]
    %v2253 = vld [vmem:[%s5 + $0x28] sm:$0xff]
    %v2254 = vld [vmem:[%s5 + $0x30] sm:$0xff]
    %v2255 = vld [vmem:[%s5 + $0x38] sm:$0xff]
    %v2256 = vlaneseq
    %v2257 = vshrl.u32 %v2256, 7
    %v2258 = vsub.s32 0, %v2257
    %v2259 = vrot.slane %v31, %v2258
    %vm2260 = vcmask 523264
    %v2262 = vsel %vm2260, %v2246, 0
    %v2265 = vsel %vm2260, %v2247, 0
    %2267 = vmatprep.subr.mxu0 0.0
    %2268 = vmatpush1.msra.mxu0 0.0
    %2269 = vmatprep.subr.mxu0 0.0
    %2270 = vmatpush1.msra.mxu0 0.0
    %2271 = vmatprep.subr.mxu0 0.0
    %2272 = vmatpush1.msra.mxu0 0.0
    %2273 = vmatprep.subr.mxu0 0.0
    %2274 = vmatpush1.msra.mxu0 0.0
    %2275 = vmatprep.subr.mxu0 0.0
    %2276 = vmatpush1.msra.mxu0 0.0
    %2277 = vmatprep.subr.mxu0 0.0
    %2278 = vmatpush1.msra.mxu0 0.0
    %2279 = vmatprep.subr.mxu0 0.0
    %2280 = vmatpush1.msra.mxu0 0.0
    %2281 = vmatprep.subr.mxu0 0.0
    %2282 = vmatpush1.msra.mxu0 0.0
    %2283 = vmatprep.subr.mxu0 0.0
    %2284 = vmatpush1.msra.mxu0 %v2255
    %2285 = vmatprep.subr.mxu0 0.0
    %2286 = vmatpush1.msra.mxu0 %v2254
    %2287 = vmatprep.subr.mxu0 0.0
    %2288 = vmatpush1.msra.mxu0 %v2253
    %2289 = vmatprep.subr.mxu0 0.0
    %2290 = vmatpush1.msra.mxu0 %v2252
    %2291 = vmatprep.subr.mxu0 0.0
    %2292 = vmatpush1.msra.mxu0 %v2251
    %2293 = vmatprep.subr.mxu0 0.0
    %2294 = vmatpush1.msra.mxu0 %v2250
    %2295 = vmatprep.subr.mxu0 0.0
    %2296 = vmatpush1.msra.mxu0 %v2249
    %2297 = vmatprep.subr.mxu0 0.0
    %2298 = vmatpush1.msra.mxu0 %v2248
    %2299 = vmatprep.subr.mxu0 0.0
    %2300 = vmatpush2.msra.mxu0 0.0
    %2301 = vmatprep.subr.mxu0 0.0
    %2302 = vmatpush2.msra.mxu0 0.0
    %2303 = vmatprep.subr.mxu0 0.0
    %2304 = vmatpush2.msra.mxu0 0.0
    %2305 = vmatprep.subr.mxu0 0.0
    %2306 = vmatpush2.msra.mxu0 0.0
    %2307 = vmatprep.subr.mxu0 0.0
    %2308 = vmatpush2.msra.mxu0 0.0
    %2309 = vmatprep.subr.mxu0 0.0
    %2310 = vmatpush2.msra.mxu0 0.0
    %2311 = vmatprep.subr.mxu0 0.0
    %2312 = vmatpush2.msra.mxu0 0.0
    %2313 = vmatprep.subr.mxu0 0.0
    %2314 = vmatpush2.msra.mxu0 0.0
    %2315 = vmatprep.subr.mxu0 0.0
    %2316 = vmatpush2.msra.mxu0 0.0
    %2317 = vmatprep.subr.mxu0 0.0
    %2318 = vmatpush2.msra.mxu0 0.0
    %2319 = vmatprep.subr.mxu0 0.0
    %2320 = vmatpush2.msra.mxu0 0.0
    %2321 = vmatprep.subr.mxu0 0.0
    %2322 = vmatpush2.msra.mxu0 0.0
    %2323 = vmatprep.subr.mxu0 0.0
    %2324 = vmatpush2.msra.mxu0 0.0
    %2325 = vmatprep.subr.mxu0 0.0
    %2326 = vmatpush2.msra.mxu0 0.0
    %2327 = vmatprep.subr.mxu0 0.0
    %2328 = vmatpush2.msra.mxu0 0.0
    %2329 = vmatprep.subr.mxu0 0.0
    %2330 = vmatpush2.msra.mxu0 0.0
    %2331 = vmatprep.mubr.f32.mxu0 0.0
    %2332 = vmatmul.mubr.f32.gmra.mxu0 %v2262
    %v2333 = vpop.f32.mrf.mxu0
    %v2334 = vadd.f32 %v2259, %v2333
    %v2335 = vpop.f32.mrf.mxu0
    %2336 = vmatprep.mubr.f32.mxu0 0.0
    %2337 = vmatmul.mubr.f32.gmra.mxu0 %v2265
    %v2338 = vpop.f32.mrf.mxu0
    %v2339 = vadd.f32 %v2259, %v2338
    %v2340 = vpop.f32.mrf.mxu0
    %2341 = vdwg.mxu0
    %v2342 = vadd.f32 %v2103, %v2334
    %v2343 = vadd.f32 %v2104, %v2339
    %2344 = vst.msk [vmem:[#allocation2] sm:$0xff] %vm35, %v2342
    %2345 = vst.msk [vmem:[#allocation2 + $0x8] sm:$0xff] %vm35, %v2343
    // Predicated region
    $region26: #{encoder_layer_forward.1} parent=1 // pred_check
      _
    $region27: #{encoder_layer_forward.1} parent=1 // pred_check_branch
      %2347 = sbr.rel (0) target = $region29
    $region28: #{encoder_layer_forward.1} parent=1 // pred_region
      %s2349 = ssub.s32 256, 256
      %2350 = vsyncadd [#allocation3], %s2349
      %s2351 = sshll.u32 [#allocation2], 4
      %s2352 = int_to_ptr.vmem [resolvable:$true] %s2351
      %2357 = dma.vmem_to_hbm [thread:$0]  %s2352, 256, %s6, [#allocation3], 128, 128, 8
    $region29: #{encoder_layer_forward.1} parent=1 // pred_fallthru
      _
    // Predicated region
    $region30: #{encoder_layer_forward.1} parent=1 // pred_check
      _
    $region31: #{encoder_layer_forward.1} parent=1 // pred_check_branch
      %2359 = sbr.rel (0) target = $region33
    $region32: #{encoder_layer_forward.1} parent=1 // pred_region
      %2360 = dma.done [#allocation3], 256
    $region33: #{encoder_layer_forward.1} parent=1 // pred_fallthru
      _
    %2361 = vsyncpa [#allocation3], 1

</llo_original>
